<compile_context>
chip_gen: v6e
topology: v6e:2x2x1
jax: 0.10.0
libtpu: 0.0.40
codegen_flags: <defaults>
</compile_context>

<pallas_src>
import jax
import jax.numpy as jnp
from jax.experimental import pallas as pl
from jax.experimental.pallas import tpu as pltpu

_LANE = 128
_SUBLANE = 8


def _round_up(x, m):
    return (x + m - 1) // m * m


def _apply_act(h, act):
    if act == "tanh":
        return jnp.tanh(h)
    if act == "sigmoid":
        return jax.nn.sigmoid(h)
    if act == "none":
        return h
    raise ValueError(f"unknown activation {act!r}")


# ----------------------------------------------------------------------------
# Fused kernel body:  h = act_i(h @ W_i + b_i)  for all layers, in vregs.
# ----------------------------------------------------------------------------
def _make_poly_mlp_kernel(acts):
    """acts: per-layer activation names (static tuple).

    Ref layout: (x_ref, w_slab_ref, b_slab_ref, o_ref).
      x_ref      : (tile_b, Dpad)      VMEM, batch-tiled
      w_slab_ref : (L, Dpad, Dpad)     VMEM, resident across grid steps
      b_slab_ref : (L, 1, Dpad)        VMEM, resident across grid steps
      o_ref      : (tile_b, Dpad)      VMEM, lane-dense output slab
    """
    n_layers = len(acts)

    def kernel(x_ref, w_slab_ref, b_slab_ref, o_ref):
        h = x_ref[...]
        for i in range(n_layers):               # static unroll
            w = w_slab_ref[i]                   # (Dpad, Dpad) static view
            b = b_slab_ref[i]                   # (1, Dpad)
            h = jnp.dot(h, w,
                        preferred_element_type=jnp.float32,
                        precision=jax.lax.Precision.HIGHEST)
            h = h + b
            h = _apply_act(h, acts[i])
        o_ref[...] = h.astype(o_ref.dtype)

    return kernel


# ----------------------------------------------------------------------------
# Parameter construction (matches nn.Linear default init) + host-side packing
# ----------------------------------------------------------------------------
def init_poly_linear(key, layer_config):
    """uniform(-1/sqrt(fan_in), 1/sqrt(fan_in)) for weight and bias.
    Weights stored transposed: (in_features, out_features)."""
    params = []
    for d_in, d_out in zip(layer_config[:-1], layer_config[1:]):
        key, kw, kb = jax.random.split(key, 3)
        bound = 1.0 / float(d_in) ** 0.5
        w_t = jax.random.uniform(kw, (d_in, d_out), jnp.float32, -bound, bound)
        b = jax.random.uniform(kb, (d_out,), jnp.float32, -bound, bound)
        params.append((w_t, b))
    return params


def pack_poly_linear_params(params):
    """Pack per-layer (W_t, b) into two zero-padded, lane-dense slabs."""
    dims = [params[0][0].shape[0]] + [w.shape[1] for w, _ in params]
    d_pad = _round_up(max(dims), _LANE)
    n_layers = len(params)
    w_slab = jnp.zeros((n_layers, d_pad, d_pad), jnp.float32)
    b_slab = jnp.zeros((n_layers, 1, d_pad), jnp.float32)
    for i, (w_t, b) in enumerate(params):
        d_in, d_out = w_t.shape
        w_slab = w_slab.at[i, :d_in, :d_out].set(w_t)
        b_slab = b_slab.at[i, 0, :d_out].set(b)
    return {"w": w_slab, "b": b_slab, "dims": tuple(dims), "d_pad": d_pad}


# ----------------------------------------------------------------------------
# Forward:  x -> [Linear -> act] * (L-1) -> Linear -> output_fn
# ----------------------------------------------------------------------------
def poly_linear_forward(packed, x, activation="tanh", output_fn="sigmoid"):
    w_slab, b_slab = packed["w"], packed["b"]
    dims, d_pad = packed["dims"], packed["d_pad"]
    n_layers = w_slab.shape[0]
    d_in0, d_out_final = dims[0], dims[-1]

    acts = tuple(
        activation if i < n_layers - 1
        else (output_fn if output_fn is not None else "none")
        for i in range(n_layers)
    )

    B = x.shape[0]
    tile_b = min(128, _round_up(B, _SUBLANE))
    b_pad = _round_up(B, tile_b)
    grid_b = b_pad // tile_b

    # Lane-dense, sublane-aligned input slab (zeros in padding rows/cols).
    x_p = jnp.zeros((b_pad, d_pad), x.dtype).at[:B, :d_in0].set(x)

    # Advisory cost estimate (padded sizes are what actually runs).
    itemsize = 4
    flops = 2 * b_pad * d_pad * d_pad * n_layers
    transcendentals = sum(
        b_pad * d_pad for a in acts if a in ("tanh", "sigmoid"))
    bytes_accessed = (x_p.size + w_slab.size + b_slab.size
                      + b_pad * d_pad) * itemsize

    kernel = _make_poly_mlp_kernel(acts)

    out_p = pl.pallas_call(
        kernel,
        out_shape=jax.ShapeDtypeStruct((b_pad, d_pad), x.dtype),
        grid_spec=pltpu.PrefetchScalarGridSpec(
            num_scalar_prefetch=0,
            grid=(grid_b,),
            in_specs=[
                # batch-tiled activations
                pl.BlockSpec((tile_b, d_pad), lambda i: (i, 0)),
                # weight / bias slabs: constant block -> DMA'd once, resident
                pl.BlockSpec((n_layers, d_pad, d_pad), lambda i: (0, 0, 0)),
                pl.BlockSpec((n_layers, 1, d_pad), lambda i: (0, 0, 0)),
            ],
            out_specs=pl.BlockSpec((tile_b, d_pad), lambda i: (i, 0)),
        ),
        compiler_params=pltpu.CompilerParams(
            dimension_semantics=("parallel",)),
        cost_estimate=pl.CostEstimate(
            flops=flops,
            transcendentals=transcendentals,
            bytes_accessed=bytes_accessed),
    )(x_p, w_slab, b_slab)

    # Free layout plumbing back to the caller-visible shape.
    return out_p[:B, :d_out_final]
    # TODO(synk): input_dropout (train-mode Bernoulli mask) not implemented;
    # PolyLinear in eval mode makes it identity.


# Pure-JAX reference (same activation dispatch, same matmul precision).
def poly_linear_reference(params, x, activation="tanh", output_fn="sigmoid"):
    n_layers = len(params)
    h = x
    for i, (w_t, b) in enumerate(params):
        h = jnp.dot(h, w_t, precision=jax.lax.Precision.HIGHEST) + b
        act = activation if i < n_layers - 1 else (
            output_fn if output_fn is not None else "none")
        h = _apply_act(h, act)
    return h


if __name__ == "__main__":
    # PolyLinear(layer_config=[32, 64, 48, 16], activation_fn=Tanh(),
    #            output_fn=Sigmoid())
    layer_config = [32, 64, 48, 16]
    batch = 8

    key = jax.random.PRNGKey(0)
    key, kx = jax.random.split(key)
    x = jax.random.normal(kx, (batch, layer_config[0]), jnp.float32)

    params = init_poly_linear(key, layer_config)
    packed = pack_poly_linear_params(params)

    out = poly_linear_forward(packed, x)
    out = jax.block_until_ready(out)

    ref = poly_linear_reference(params, x)
    assert out.shape == (batch, layer_config[-1])
    assert jnp.allclose(out, ref, atol=1e-5, rtol=1e-5), float(
        jnp.max(jnp.abs(out - ref)))

    print("KERNEL_OK")
</pallas_src>

<mosaic_0001>
module attributes {stable_mosaic.version = 11 : i64} {
  func.func @kernel(%arg0: i32, %arg1: memref<8x128xf32, #tpu.memory_space<vmem>>, %arg2: memref<3x128x128xf32, #tpu.memory_space<vmem>>, %arg3: memref<3x1x128xf32, #tpu.memory_space<vmem>>, %arg4: memref<8x128xf32, #tpu.memory_space<vmem>>) attributes {dimension_semantics = [#tpu.dimension_semantics<parallel>], iteration_bounds = array<i64: 1>, scalar_prefetch = 0 : i64, scratch_operands = 0 : i64, tpu.core_type = #tpu.core_type<tc>, window_params = [{transform_indices = @transform_0, window_bounds = array<i64: 8, 128>}, {pipeline_mode = #tpu.pipeline_mode<synchronous>, transform_indices = @transform_1, window_bounds = array<i64: 3, 128, 128>}, {pipeline_mode = #tpu.pipeline_mode<synchronous>, transform_indices = @transform_2, window_bounds = array<i64: 3, 1, 128>}, {transform_indices = @transform_3, window_bounds = array<i64: 8, 128>}]} {
    %c0 = arith.constant 0 : index
    %c0_0 = arith.constant 0 : index
    %0 = vector.load %arg1[%c0, %c0_0] : memref<8x128xf32, #tpu.memory_space<vmem>>, vector<8x128xf32>
    %c0_1 = arith.constant 0 : index
    %c0_2 = arith.constant 0 : index
    %c0_3 = arith.constant 0 : index
    %1 = vector.load %arg2[%c0_1, %c0_2, %c0_3] : memref<3x128x128xf32, #tpu.memory_space<vmem>>, vector<1x128x128xf32>
    %2 = vector.shape_cast %1 : vector<1x128x128xf32> to vector<128x128xf32>
    %c0_4 = arith.constant 0 : index
    %c0_5 = arith.constant 0 : index
    %c0_6 = arith.constant 0 : index
    %3 = vector.load %arg3[%c0_4, %c0_5, %c0_6] : memref<3x1x128xf32, #tpu.memory_space<vmem>>, vector<1x1x128xf32>
    %4 = vector.shape_cast %3 : vector<1x1x128xf32> to vector<1x128xf32>
    %cst = arith.constant dense<0.000000e+00> : vector<8x128xf32>
    %5 = tpu.matmul %0, %2, %cst {dimension_numbers = #tpu.dot_dimension_numbers<[1], [0], [0], [1], [0, 0, 1, 1], [], []>, precision = #tpu.contract_precision<fp32>} : vector<8x128xf32>, vector<128x128xf32>, vector<8x128xf32> -> vector<8x128xf32>
    %6 = vector.broadcast %4 : vector<1x128xf32> to vector<8x128xf32>
    %7 = arith.addf %5, %6 : vector<8x128xf32>
    %8 = math.tanh %7 : vector<8x128xf32>
    %c1 = arith.constant 1 : index
    %c0_7 = arith.constant 0 : index
    %c0_8 = arith.constant 0 : index
    %9 = vector.load %arg2[%c1, %c0_7, %c0_8] : memref<3x128x128xf32, #tpu.memory_space<vmem>>, vector<1x128x128xf32>
    %10 = vector.shape_cast %9 : vector<1x128x128xf32> to vector<128x128xf32>
    %c1_9 = arith.constant 1 : index
    %c0_10 = arith.constant 0 : index
    %c0_11 = arith.constant 0 : index
    %11 = vector.load %arg3[%c1_9, %c0_10, %c0_11] : memref<3x1x128xf32, #tpu.memory_space<vmem>>, vector<1x1x128xf32>
    %12 = vector.shape_cast %11 : vector<1x1x128xf32> to vector<1x128xf32>
    %cst_12 = arith.constant dense<0.000000e+00> : vector<8x128xf32>
    %13 = tpu.matmul %8, %10, %cst_12 {dimension_numbers = #tpu.dot_dimension_numbers<[1], [0], [0], [1], [0, 0, 1, 1], [], []>, precision = #tpu.contract_precision<fp32>} : vector<8x128xf32>, vector<128x128xf32>, vector<8x128xf32> -> vector<8x128xf32>
    %14 = vector.broadcast %12 : vector<1x128xf32> to vector<8x128xf32>
    %15 = arith.addf %13, %14 : vector<8x128xf32>
    %16 = math.tanh %15 : vector<8x128xf32>
    %c2 = arith.constant 2 : index
    %c0_13 = arith.constant 0 : index
    %c0_14 = arith.constant 0 : index
    %17 = vector.load %arg2[%c2, %c0_13, %c0_14] : memref<3x128x128xf32, #tpu.memory_space<vmem>>, vector<1x128x128xf32>
    %18 = vector.shape_cast %17 : vector<1x128x128xf32> to vector<128x128xf32>
    %c2_15 = arith.constant 2 : index
    %c0_16 = arith.constant 0 : index
    %c0_17 = arith.constant 0 : index
    %19 = vector.load %arg3[%c2_15, %c0_16, %c0_17] : memref<3x1x128xf32, #tpu.memory_space<vmem>>, vector<1x1x128xf32>
    %20 = vector.shape_cast %19 : vector<1x1x128xf32> to vector<1x128xf32>
    %cst_18 = arith.constant dense<0.000000e+00> : vector<8x128xf32>
    %21 = tpu.matmul %16, %18, %cst_18 {dimension_numbers = #tpu.dot_dimension_numbers<[1], [0], [0], [1], [0, 0, 1, 1], [], []>, precision = #tpu.contract_precision<fp32>} : vector<8x128xf32>, vector<128x128xf32>, vector<8x128xf32> -> vector<8x128xf32>
    %22 = vector.broadcast %20 : vector<1x128xf32> to vector<8x128xf32>
    %23 = arith.addf %21, %22 : vector<8x128xf32>
    %24 = arith.negf %23 : vector<8x128xf32>
    %25 = math.exp %24 : vector<8x128xf32>
    %cst_19 = arith.constant 1.000000e+00 : f32
    %26 = vector.broadcast %cst_19 : f32 to vector<8x128xf32>
    %27 = arith.addf %26, %25 : vector<8x128xf32>
    %28 = arith.divf %26, %27 : vector<8x128xf32>
    %c0_20 = arith.constant 0 : index
    %c0_21 = arith.constant 0 : index
    %29 = vector.load %arg4[%c0_20, %c0_21] : memref<8x128xf32, #tpu.memory_space<vmem>>, vector<8x128xf32>
    tpu.vector_store %arg4[%c0_20, %c0_21], %28 {strides = array<i32>} : memref<8x128xf32, #tpu.memory_space<vmem>>, vector<8x128xf32>,
    return
  }
  func.func @transform_0(%arg0: i32) -> (i32, i32) {
    %c0_i32 = arith.constant 0 : i32
    %c0_i32_0 = arith.constant 0 : i32
    return %arg0, %c0_i32 : i32, i32
  }
  func.func @transform_1(%arg0: i32) -> (i32, i32, i32) {
    %c0_i32 = arith.constant 0 : i32
    %c0_i32_0 = arith.constant 0 : i32
    %c0_i32_1 = arith.constant 0 : i32
    %c0_i32_2 = arith.constant 0 : i32
    return %c0_i32, %c0_i32_0, %c0_i32_1 : i32, i32, i32
  }
  func.func @transform_2(%arg0: i32) -> (i32, i32, i32) {
    %c0_i32 = arith.constant 0 : i32
    %c0_i32_0 = arith.constant 0 : i32
    %c0_i32_1 = arith.constant 0 : i32
    %c0_i32_2 = arith.constant 0 : i32
    return %c0_i32, %c0_i32_0, %c0_i32_1 : i32, i32, i32
  }
  func.func @transform_3(%arg0: i32) -> (i32, i32) {
    %c0_i32 = arith.constant 0 : i32
    %c0_i32_0 = arith.constant 0 : i32
    return %arg0, %c0_i32 : i32, i32
  }
}

</mosaic_0001>

<llo_original>
// kernel: tpu_custom_call.1
$region0: #{tpu_custom_call.1}
  #allocation0 [shape = 'u32[]', space=smem, size = 0x4, offset = 0x4, fixed_abs, tag = 'smem constant byte address 0x4 - core index']
  #allocation1 [shape = 'u32[144,128]{1,0:T(1,128)}', space=vmem, size = 0x12000, scoped, tag = 'internal scratch']
  %s0 = inlined_call_operand.hbm [shape: f32[8,128], index: 0, kind: input, shape index: {}]
  %s1 = inlined_call_operand.hbm [shape: f32[3,128,128], index: 1, kind: input, shape index: {}]
  %s2 = inlined_call_operand.vmem [shape: f32[3,1,128], index: 2, kind: input, shape index: {}]
  %s3 = inlined_call_operand.hbm [shape: f32[8,128], index: 3, kind: output, shape index: {}]
  %s4 = sld [smem:[#allocation0]]
  $region30: #{tpu_custom_call.1} parent=0
    _
  %s6 = ssub.s32 1, %s4
  %s7 = scalar_select 0, %s6, %s4
  $region1: #{tpu_custom_call.1} parent=0
    #allocation2 [shape = 'u8[4096]{0}', space=vmem, size = 0x1000, scoped, tag = 'input window, operand 0, single buffered']
    #allocation3 [shape = 's32[1]{0}', space=sflag, size = 0x4, scoped, tag = 'scoped memory for tpu_custom_call.1']
    #allocation4 [shape = 's32[1]{0}', space=sflag, size = 0x4, scoped, tag = 'scoped memory for tpu_custom_call.1']
    #allocation5 [shape = 'u8[196608]{0}', space=vmem, size = 0x30000, scoped, tag = 'input window, operand 1, single buffered']
    #allocation6 [shape = 's32[1]{0}', space=sflag, size = 0x4, scoped, tag = 'scoped memory for tpu_custom_call.1']
    #allocation7 [shape = 'u8[4096]{0}', space=vmem, size = 0x1000, scoped, tag = 'output window, operand 0, single buffered']
    %8 = vsyncpa [#allocation3], 0
    %9 = vsyncpa [#allocation6], 0
    %10 = vsyncpa [#allocation4], 0
    // Predicated region
    $region2: #{tpu_custom_call.1} parent=1 // pred_check
      _
    $region3: #{tpu_custom_call.1} parent=1 // pred_check_branch
      %12 = sbr.rel (0) target = $region5
    $region4: #{tpu_custom_call.1} parent=1 // pred_region
      %s14 = ssub.s32 128, 128
      %15 = vsyncadd [#allocation3], %s14
      %s17 = sshll.u32 [#allocation2], 4
      %s18 = int_to_ptr.vmem [resolvable:$true] %s17
      %20 = dma.hbm_to_vmem [thread:$0]  %s0, 128, %s18, [#allocation3]
    $region5: #{tpu_custom_call.1} parent=1 // pred_fallthru
      _
    // Predicated region
    $region6: #{tpu_custom_call.1} parent=1 // pred_check
      _
    $region7: #{tpu_custom_call.1} parent=1 // pred_check_branch
      %22 = sbr.rel (0) target = $region9
    $region8: #{tpu_custom_call.1} parent=1 // pred_region
      %s24 = ssub.s32 6144, 6144
      %25 = vsyncadd [#allocation6], %s24
      %s26 = sshll.u32 [#allocation5], 4
      %s27 = int_to_ptr.vmem [resolvable:$true] %s26
      %32 = dma.hbm_to_vmem [thread:$0]  %s1, 6144, %s27, [#allocation6], 128, 128, 8
    $region9: #{tpu_custom_call.1} parent=1 // pred_fallthru
      _
    // Predicated region
    $region10: #{tpu_custom_call.1} parent=1 // pred_check
      _
    $region11: #{tpu_custom_call.1} parent=1 // pred_check_branch
      %34 = sbr.rel (0) target = $region13
    $region12: #{tpu_custom_call.1} parent=1 // pred_region
      _
    $region13: #{tpu_custom_call.1} parent=1 // pred_fallthru
      _
    // Predicated region
    $region14: #{tpu_custom_call.1} parent=1 // pred_check
      _
    $region15: #{tpu_custom_call.1} parent=1 // pred_check_branch
      %36 = sbr.rel (0) target = $region17
    $region16: #{tpu_custom_call.1} parent=1 // pred_region
      %37 = dma.done [#allocation3], 128
    $region17: #{tpu_custom_call.1} parent=1 // pred_fallthru
      _
    // Predicated region
    $region18: #{tpu_custom_call.1} parent=1 // pred_check
      _
    $region19: #{tpu_custom_call.1} parent=1 // pred_check_branch
      %39 = sbr.rel (0) target = $region21
    $region20: #{tpu_custom_call.1} parent=1 // pred_region
      %40 = dma.done [#allocation6], 6144
    $region21: #{tpu_custom_call.1} parent=1 // pred_fallthru
      _
    %v41 = vld [vmem:[#allocation2] sm:$0xff]
    %v42 = vld [vmem:[#allocation5] sm:$0xff]
    %v43 = vld [vmem:[#allocation5 + $0x8] sm:$0xff]
    %v44 = vld [vmem:[#allocation5 + $0x10] sm:$0xff]
    %v45 = vld [vmem:[#allocation5 + $0x18] sm:$0xff]
    %v46 = vld [vmem:[#allocation5 + $0x20] sm:$0xff]
    %v47 = vld [vmem:[#allocation5 + $0x28] sm:$0xff]
    %v48 = vld [vmem:[#allocation5 + $0x30] sm:$0xff]
    %v49 = vld [vmem:[#allocation5 + $0x38] sm:$0xff]
    %v50 = vld [vmem:[#allocation5 + $0x40] sm:$0xff]
    %v51 = vld [vmem:[#allocation5 + $0x48] sm:$0xff]
    %v52 = vld [vmem:[#allocation5 + $0x50] sm:$0xff]
    %v53 = vld [vmem:[#allocation5 + $0x58] sm:$0xff]
    %v54 = vld [vmem:[#allocation5 + $0x60] sm:$0xff]
    %v55 = vld [vmem:[#allocation5 + $0x68] sm:$0xff]
    %v56 = vld [vmem:[#allocation5 + $0x70] sm:$0xff]
    %v57 = vld [vmem:[#allocation5 + $0x78] sm:$0xff]
    %v58 = vld [vmem:[%s2] sm:$0x1]
    %v60 = vlaneseq
    %v61 = vshrl.u32 %v60, 7
    %v62 = vsub.s32 0, %v61
    %v63 = vrot.slane %v58, %v62
    %65 = vmatprep.subr.mxu0 0.0
    %v66 = vand.u32 %v57, 4294901760
    %67 = vmatpush1.msra.mxu0 %v66
    %68 = vmatprep.subr.mxu0 0.0
    %v69 = vand.u32 %v56, 4294901760
    %70 = vmatpush1.msra.mxu0 %v69
    %71 = vmatprep.subr.mxu0 0.0
    %v72 = vand.u32 %v55, 4294901760
    %73 = vmatpush1.msra.mxu0 %v72
    %74 = vmatprep.subr.mxu0 0.0
    %v75 = vand.u32 %v54, 4294901760
    %76 = vmatpush1.msra.mxu0 %v75
    %77 = vmatprep.subr.mxu0 0.0
    %v78 = vand.u32 %v53, 4294901760
    %79 = vmatpush1.msra.mxu0 %v78
    %80 = vmatprep.subr.mxu0 0.0
    %v81 = vand.u32 %v52, 4294901760
    %82 = vmatpush1.msra.mxu0 %v81
    %83 = vmatprep.subr.mxu0 0.0
    %v84 = vand.u32 %v51, 4294901760
    %85 = vmatpush1.msra.mxu0 %v84
    %86 = vmatprep.subr.mxu0 0.0
    %v87 = vand.u32 %v50, 4294901760
    %88 = vmatpush1.msra.mxu0 %v87
    %89 = vmatprep.subr.mxu0 0.0
    %v90 = vand.u32 %v49, 4294901760
    %91 = vmatpush1.msra.mxu0 %v90
    %92 = vmatprep.subr.mxu0 0.0
    %v93 = vand.u32 %v48, 4294901760
    %94 = vmatpush1.msra.mxu0 %v93
    %95 = vmatprep.subr.mxu0 0.0
    %v96 = vand.u32 %v47, 4294901760
    %97 = vmatpush1.msra.mxu0 %v96
    %98 = vmatprep.subr.mxu0 0.0
    %v99 = vand.u32 %v46, 4294901760
    %100 = vmatpush1.msra.mxu0 %v99
    %101 = vmatprep.subr.mxu0 0.0
    %v102 = vand.u32 %v45, 4294901760
    %103 = vmatpush1.msra.mxu0 %v102
    %104 = vmatprep.subr.mxu0 0.0
    %v105 = vand.u32 %v44, 4294901760
    %106 = vmatpush1.msra.mxu0 %v105
    %107 = vmatprep.subr.mxu0 0.0
    %v108 = vand.u32 %v43, 4294901760
    %109 = vmatpush1.msra.mxu0 %v108
    %110 = vmatprep.subr.mxu0 0.0
    %v111 = vand.u32 %v42, 4294901760
    %112 = vmatpush1.msra.mxu0 %v111
    %113 = vmatprep.subr.mxu0 0.0
    %114 = vmatpush2.msra.mxu0 0.0
    %115 = vmatprep.subr.mxu0 0.0
    %116 = vmatpush2.msra.mxu0 0.0
    %117 = vmatprep.subr.mxu0 0.0
    %118 = vmatpush2.msra.mxu0 0.0
    %119 = vmatprep.subr.mxu0 0.0
    %120 = vmatpush2.msra.mxu0 0.0
    %121 = vmatprep.subr.mxu0 0.0
    %122 = vmatpush2.msra.mxu0 0.0
    %123 = vmatprep.subr.mxu0 0.0
    %124 = vmatpush2.msra.mxu0 0.0
    %125 = vmatprep.subr.mxu0 0.0
    %126 = vmatpush2.msra.mxu0 0.0
    %127 = vmatprep.subr.mxu0 0.0
    %128 = vmatpush2.msra.mxu0 0.0
    %129 = vmatprep.subr.mxu0 0.0
    %130 = vmatpush2.msra.mxu0 0.0
    %131 = vmatprep.subr.mxu0 0.0
    %132 = vmatpush2.msra.mxu0 0.0
    %133 = vmatprep.subr.mxu0 0.0
    %134 = vmatpush2.msra.mxu0 0.0
    %135 = vmatprep.subr.mxu0 0.0
    %136 = vmatpush2.msra.mxu0 0.0
    %137 = vmatprep.subr.mxu0 0.0
    %138 = vmatpush2.msra.mxu0 0.0
    %139 = vmatprep.subr.mxu0 0.0
    %140 = vmatpush2.msra.mxu0 0.0
    %141 = vmatprep.subr.mxu0 0.0
    %142 = vmatpush2.msra.mxu0 0.0
    %143 = vmatprep.subr.mxu0 0.0
    %144 = vmatpush2.msra.mxu0 0.0
    %145 = vmatprep.mubr.f32.mxu0 0.0
    %v146 = vand.u32 %v41, 4294901760
    %v147 = vsub.f32 %v41, %v146
    %v148 = vand.u32 %v147, 4294901760
    %v149 = vsub.f32 %v147, %v148
    %v150 = vand.u32 %v149, 4294901760
    %151 = vmatmul.mubr.f32.gmra.mxu0 %v150
    %v152 = vpop.f32.mrf.mxu0
    %v153 = vadd.f32 %v63, %v152
    %v154 = vpop.f32.mrf.mxu0
    %155 = vdwg.mxu0
    %156 = vmatprep.subr.mxu0 0.0
    %v157 = vand.u32 %v57, 4294901760
    %v158 = vsub.f32 %v57, %v157
    %v159 = vand.u32 %v158, 4294901760
    %v160 = vsub.f32 %v158, %v159
    %v161 = vand.u32 %v160, 4294901760
    %162 = vmatpush1.msra.mxu0 %v161
    %163 = vmatprep.subr.mxu0 0.0
    %v164 = vand.u32 %v56, 4294901760
    %v165 = vsub.f32 %v56, %v164
    %v166 = vand.u32 %v165, 4294901760
    %v167 = vsub.f32 %v165, %v166
    %v168 = vand.u32 %v167, 4294901760
    %169 = vmatpush1.msra.mxu0 %v168
    %170 = vmatprep.subr.mxu0 0.0
    %v171 = vand.u32 %v55, 4294901760
    %v172 = vsub.f32 %v55, %v171
    %v173 = vand.u32 %v172, 4294901760
    %v174 = vsub.f32 %v172, %v173
    %v175 = vand.u32 %v174, 4294901760
    %176 = vmatpush1.msra.mxu0 %v175
    %177 = vmatprep.subr.mxu0 0.0
    %v178 = vand.u32 %v54, 4294901760
    %v179 = vsub.f32 %v54, %v178
    %v180 = vand.u32 %v179, 4294901760
    %v181 = vsub.f32 %v179, %v180
    %v182 = vand.u32 %v181, 4294901760
    %183 = vmatpush1.msra.mxu0 %v182
    %184 = vmatprep.subr.mxu0 0.0
    %v185 = vand.u32 %v53, 4294901760
    %v186 = vsub.f32 %v53, %v185
    %v187 = vand.u32 %v186, 4294901760
    %v188 = vsub.f32 %v186, %v187
    %v189 = vand.u32 %v188, 4294901760
    %190 = vmatpush1.msra.mxu0 %v189
    %191 = vmatprep.subr.mxu0 0.0
    %v192 = vand.u32 %v52, 4294901760
    %v193 = vsub.f32 %v52, %v192
    %v194 = vand.u32 %v193, 4294901760
    %v195 = vsub.f32 %v193, %v194
    %v196 = vand.u32 %v195, 4294901760
    %197 = vmatpush1.msra.mxu0 %v196
    %198 = vmatprep.subr.mxu0 0.0
    %v199 = vand.u32 %v51, 4294901760
    %v200 = vsub.f32 %v51, %v199
    %v201 = vand.u32 %v200, 4294901760
    %v202 = vsub.f32 %v200, %v201
    %v203 = vand.u32 %v202, 4294901760
    %204 = vmatpush1.msra.mxu0 %v203
    %205 = vmatprep.subr.mxu0 0.0
    %v206 = vand.u32 %v50, 4294901760
    %v207 = vsub.f32 %v50, %v206
    %v208 = vand.u32 %v207, 4294901760
    %v209 = vsub.f32 %v207, %v208
    %v210 = vand.u32 %v209, 4294901760
    %211 = vmatpush1.msra.mxu0 %v210
    %212 = vmatprep.subr.mxu0 0.0
    %v213 = vand.u32 %v49, 4294901760
    %v214 = vsub.f32 %v49, %v213
    %v215 = vand.u32 %v214, 4294901760
    %v216 = vsub.f32 %v214, %v215
    %v217 = vand.u32 %v216, 4294901760
    %218 = vmatpush1.msra.mxu0 %v217
    %219 = vmatprep.subr.mxu0 0.0
    %v220 = vand.u32 %v48, 4294901760
    %v221 = vsub.f32 %v48, %v220
    %v222 = vand.u32 %v221, 4294901760
    %v223 = vsub.f32 %v221, %v222
    %v224 = vand.u32 %v223, 4294901760
    %225 = vmatpush1.msra.mxu0 %v224
    %226 = vmatprep.subr.mxu0 0.0
    %v227 = vand.u32 %v47, 4294901760
    %v228 = vsub.f32 %v47, %v227
    %v229 = vand.u32 %v228, 4294901760
    %v230 = vsub.f32 %v228, %v229
    %v231 = vand.u32 %v230, 4294901760
    %232 = vmatpush1.msra.mxu0 %v231
    %233 = vmatprep.subr.mxu0 0.0
    %v234 = vand.u32 %v46, 4294901760
    %v235 = vsub.f32 %v46, %v234
    %v236 = vand.u32 %v235, 4294901760
    %v237 = vsub.f32 %v235, %v236
    %v238 = vand.u32 %v237, 4294901760
    %239 = vmatpush1.msra.mxu0 %v238
    %240 = vmatprep.subr.mxu0 0.0
    %v241 = vand.u32 %v45, 4294901760
    %v242 = vsub.f32 %v45, %v241
    %v243 = vand.u32 %v242, 4294901760
    %v244 = vsub.f32 %v242, %v243
    %v245 = vand.u32 %v244, 4294901760
    %246 = vmatpush1.msra.mxu0 %v245
    %247 = vmatprep.subr.mxu0 0.0
    %v248 = vand.u32 %v44, 4294901760
    %v249 = vsub.f32 %v44, %v248
    %v250 = vand.u32 %v249, 4294901760
    %v251 = vsub.f32 %v249, %v250
    %v252 = vand.u32 %v251, 4294901760
    %253 = vmatpush1.msra.mxu0 %v252
    %254 = vmatprep.subr.mxu0 0.0
    %v255 = vand.u32 %v43, 4294901760
    %v256 = vsub.f32 %v43, %v255
    %v257 = vand.u32 %v256, 4294901760
    %v258 = vsub.f32 %v256, %v257
    %v259 = vand.u32 %v258, 4294901760
    %260 = vmatpush1.msra.mxu0 %v259
    %261 = vmatprep.subr.mxu0 0.0
    %v262 = vand.u32 %v42, 4294901760
    %v263 = vsub.f32 %v42, %v262
    %v264 = vand.u32 %v263, 4294901760
    %v265 = vsub.f32 %v263, %v264
    %v266 = vand.u32 %v265, 4294901760
    %267 = vmatpush1.msra.mxu0 %v266
    %268 = vmatprep.subr.mxu0 0.0
    %269 = vmatpush2.msra.mxu0 0.0
    %270 = vmatprep.subr.mxu0 0.0
    %271 = vmatpush2.msra.mxu0 0.0
    %272 = vmatprep.subr.mxu0 0.0
    %273 = vmatpush2.msra.mxu0 0.0
    %274 = vmatprep.subr.mxu0 0.0
    %275 = vmatpush2.msra.mxu0 0.0
    %276 = vmatprep.subr.mxu0 0.0
    %277 = vmatpush2.msra.mxu0 0.0
    %278 = vmatprep.subr.mxu0 0.0
    %279 = vmatpush2.msra.mxu0 0.0
    %280 = vmatprep.subr.mxu0 0.0
    %281 = vmatpush2.msra.mxu0 0.0
    %282 = vmatprep.subr.mxu0 0.0
    %283 = vmatpush2.msra.mxu0 0.0
    %284 = vmatprep.subr.mxu0 0.0
    %285 = vmatpush2.msra.mxu0 0.0
    %286 = vmatprep.subr.mxu0 0.0
    %287 = vmatpush2.msra.mxu0 0.0
    %288 = vmatprep.subr.mxu0 0.0
    %289 = vmatpush2.msra.mxu0 0.0
    %290 = vmatprep.subr.mxu0 0.0
    %291 = vmatpush2.msra.mxu0 0.0
    %292 = vmatprep.subr.mxu0 0.0
    %293 = vmatpush2.msra.mxu0 0.0
    %294 = vmatprep.subr.mxu0 0.0
    %295 = vmatpush2.msra.mxu0 0.0
    %296 = vmatprep.subr.mxu0 0.0
    %297 = vmatpush2.msra.mxu0 0.0
    %298 = vmatprep.subr.mxu0 0.0
    %299 = vmatpush2.msra.mxu0 0.0
    %300 = vmatprep.mubr.f32.mxu0 0.0
    %v301 = vand.u32 %v41, 4294901760
    %302 = vmatmul.mubr.f32.gmra.mxu0 %v301
    %v303 = vpop.f32.mrf.mxu0
    %v304 = vadd.f32 %v153, %v303
    %v305 = vpop.f32.mrf.mxu0
    %306 = vdwg.mxu0
    %307 = vmatprep.subr.mxu0 0.0
    %v308 = vand.u32 %v57, 4294901760
    %v309 = vsub.f32 %v57, %v308
    %310 = vmatpush1.msra.mxu0 %v309
    %311 = vmatprep.subr.mxu0 0.0
    %v312 = vand.u32 %v56, 4294901760
    %v313 = vsub.f32 %v56, %v312
    %314 = vmatpush1.msra.mxu0 %v313
    %315 = vmatprep.subr.mxu0 0.0
    %v316 = vand.u32 %v55, 4294901760
    %v317 = vsub.f32 %v55, %v316
    %318 = vmatpush1.msra.mxu0 %v317
    %319 = vmatprep.subr.mxu0 0.0
    %v320 = vand.u32 %v54, 4294901760
    %v321 = vsub.f32 %v54, %v320
    %322 = vmatpush1.msra.mxu0 %v321
    %323 = vmatprep.subr.mxu0 0.0
    %v324 = vand.u32 %v53, 4294901760
    %v325 = vsub.f32 %v53, %v324
    %326 = vmatpush1.msra.mxu0 %v325
    %327 = vmatprep.subr.mxu0 0.0
    %v328 = vand.u32 %v52, 4294901760
    %v329 = vsub.f32 %v52, %v328
    %330 = vmatpush1.msra.mxu0 %v329
    %331 = vmatprep.subr.mxu0 0.0
    %v332 = vand.u32 %v51, 4294901760
    %v333 = vsub.f32 %v51, %v332
    %334 = vmatpush1.msra.mxu0 %v333
    %335 = vmatprep.subr.mxu0 0.0
    %v336 = vand.u32 %v50, 4294901760
    %v337 = vsub.f32 %v50, %v336
    %338 = vmatpush1.msra.mxu0 %v337
    %339 = vmatprep.subr.mxu0 0.0
    %v340 = vand.u32 %v49, 4294901760
    %v341 = vsub.f32 %v49, %v340
    %342 = vmatpush1.msra.mxu0 %v341
    %343 = vmatprep.subr.mxu0 0.0
    %v344 = vand.u32 %v48, 4294901760
    %v345 = vsub.f32 %v48, %v344
    %346 = vmatpush1.msra.mxu0 %v345
    %347 = vmatprep.subr.mxu0 0.0
    %v348 = vand.u32 %v47, 4294901760
    %v349 = vsub.f32 %v47, %v348
    %350 = vmatpush1.msra.mxu0 %v349
    %351 = vmatprep.subr.mxu0 0.0
    %v352 = vand.u32 %v46, 4294901760
    %v353 = vsub.f32 %v46, %v352
    %354 = vmatpush1.msra.mxu0 %v353
    %355 = vmatprep.subr.mxu0 0.0
    %v356 = vand.u32 %v45, 4294901760
    %v357 = vsub.f32 %v45, %v356
    %358 = vmatpush1.msra.mxu0 %v357
    %359 = vmatprep.subr.mxu0 0.0
    %v360 = vand.u32 %v44, 4294901760
    %v361 = vsub.f32 %v44, %v360
    %362 = vmatpush1.msra.mxu0 %v361
    %363 = vmatprep.subr.mxu0 0.0
    %v364 = vand.u32 %v43, 4294901760
    %v365 = vsub.f32 %v43, %v364
    %366 = vmatpush1.msra.mxu0 %v365
    %367 = vmatprep.subr.mxu0 0.0
    %v368 = vand.u32 %v42, 4294901760
    %v369 = vsub.f32 %v42, %v368
    %370 = vmatpush1.msra.mxu0 %v369
    %371 = vmatprep.subr.mxu0 0.0
    %372 = vmatpush2.msra.mxu0 0.0
    %373 = vmatprep.subr.mxu0 0.0
    %374 = vmatpush2.msra.mxu0 0.0
    %375 = vmatprep.subr.mxu0 0.0
    %376 = vmatpush2.msra.mxu0 0.0
    %377 = vmatprep.subr.mxu0 0.0
    %378 = vmatpush2.msra.mxu0 0.0
    %379 = vmatprep.subr.mxu0 0.0
    %380 = vmatpush2.msra.mxu0 0.0
    %381 = vmatprep.subr.mxu0 0.0
    %382 = vmatpush2.msra.mxu0 0.0
    %383 = vmatprep.subr.mxu0 0.0
    %384 = vmatpush2.msra.mxu0 0.0
    %385 = vmatprep.subr.mxu0 0.0
    %386 = vmatpush2.msra.mxu0 0.0
    %387 = vmatprep.subr.mxu0 0.0
    %388 = vmatpush2.msra.mxu0 0.0
    %389 = vmatprep.subr.mxu0 0.0
    %390 = vmatpush2.msra.mxu0 0.0
    %391 = vmatprep.subr.mxu0 0.0
    %392 = vmatpush2.msra.mxu0 0.0
    %393 = vmatprep.subr.mxu0 0.0
    %394 = vmatpush2.msra.mxu0 0.0
    %395 = vmatprep.subr.mxu0 0.0
    %396 = vmatpush2.msra.mxu0 0.0
    %397 = vmatprep.subr.mxu0 0.0
    %398 = vmatpush2.msra.mxu0 0.0
    %399 = vmatprep.subr.mxu0 0.0
    %400 = vmatpush2.msra.mxu0 0.0
    %401 = vmatprep.subr.mxu0 0.0
    %402 = vmatpush2.msra.mxu0 0.0
    %403 = vmatprep.mubr.f32.mxu0 0.0
    %v404 = vand.u32 %v41, 4294901760
    %v405 = vsub.f32 %v41, %v404
    %406 = vmatmul.mubr.f32.gmra.mxu0 %v405
    %v407 = vpop.f32.mrf.mxu0
    %v408 = vadd.f32 %v304, %v407
    %v409 = vpop.f32.mrf.mxu0
    %410 = vdwg.mxu0
    %411 = vmatprep.subr.mxu0 0.0
    %v412 = vand.u32 %v57, 4294901760
    %413 = vmatpush1.msra.mxu0 %v412
    %414 = vmatprep.subr.mxu0 0.0
    %v415 = vand.u32 %v56, 4294901760
    %416 = vmatpush1.msra.mxu0 %v415
    %417 = vmatprep.subr.mxu0 0.0
    %v418 = vand.u32 %v55, 4294901760
    %419 = vmatpush1.msra.mxu0 %v418
    %420 = vmatprep.subr.mxu0 0.0
    %v421 = vand.u32 %v54, 4294901760
    %422 = vmatpush1.msra.mxu0 %v421
    %423 = vmatprep.subr.mxu0 0.0
    %v424 = vand.u32 %v53, 4294901760
    %425 = vmatpush1.msra.mxu0 %v424
    %426 = vmatprep.subr.mxu0 0.0
    %v427 = vand.u32 %v52, 4294901760
    %428 = vmatpush1.msra.mxu0 %v427
    %429 = vmatprep.subr.mxu0 0.0
    %v430 = vand.u32 %v51, 4294901760
    %431 = vmatpush1.msra.mxu0 %v430
    %432 = vmatprep.subr.mxu0 0.0
    %v433 = vand.u32 %v50, 4294901760
    %434 = vmatpush1.msra.mxu0 %v433
    %435 = vmatprep.subr.mxu0 0.0
    %v436 = vand.u32 %v49, 4294901760
    %437 = vmatpush1.msra.mxu0 %v436
    %438 = vmatprep.subr.mxu0 0.0
    %v439 = vand.u32 %v48, 4294901760
    %440 = vmatpush1.msra.mxu0 %v439
    %441 = vmatprep.subr.mxu0 0.0
    %v442 = vand.u32 %v47, 4294901760
    %443 = vmatpush1.msra.mxu0 %v442
    %444 = vmatprep.subr.mxu0 0.0
    %v445 = vand.u32 %v46, 4294901760
    %446 = vmatpush1.msra.mxu0 %v445
    %447 = vmatprep.subr.mxu0 0.0
    %v448 = vand.u32 %v45, 4294901760
    %449 = vmatpush1.msra.mxu0 %v448
    %450 = vmatprep.subr.mxu0 0.0
    %v451 = vand.u32 %v44, 4294901760
    %452 = vmatpush1.msra.mxu0 %v451
    %453 = vmatprep.subr.mxu0 0.0
    %v454 = vand.u32 %v43, 4294901760
    %455 = vmatpush1.msra.mxu0 %v454
    %456 = vmatprep.subr.mxu0 0.0
    %v457 = vand.u32 %v42, 4294901760
    %458 = vmatpush1.msra.mxu0 %v457
    %459 = vmatprep.subr.mxu0 0.0
    %460 = vmatpush2.msra.mxu0 0.0
    %461 = vmatprep.subr.mxu0 0.0
    %462 = vmatpush2.msra.mxu0 0.0
    %463 = vmatprep.subr.mxu0 0.0
    %464 = vmatpush2.msra.mxu0 0.0
    %465 = vmatprep.subr.mxu0 0.0
    %466 = vmatpush2.msra.mxu0 0.0
    %467 = vmatprep.subr.mxu0 0.0
    %468 = vmatpush2.msra.mxu0 0.0
    %469 = vmatprep.subr.mxu0 0.0
    %470 = vmatpush2.msra.mxu0 0.0
    %471 = vmatprep.subr.mxu0 0.0
    %472 = vmatpush2.msra.mxu0 0.0
    %473 = vmatprep.subr.mxu0 0.0
    %474 = vmatpush2.msra.mxu0 0.0
    %475 = vmatprep.subr.mxu0 0.0
    %476 = vmatpush2.msra.mxu0 0.0
    %477 = vmatprep.subr.mxu0 0.0
    %478 = vmatpush2.msra.mxu0 0.0
    %479 = vmatprep.subr.mxu0 0.0
    %480 = vmatpush2.msra.mxu0 0.0
    %481 = vmatprep.subr.mxu0 0.0
    %482 = vmatpush2.msra.mxu0 0.0
    %483 = vmatprep.subr.mxu0 0.0
    %484 = vmatpush2.msra.mxu0 0.0
    %485 = vmatprep.subr.mxu0 0.0
    %486 = vmatpush2.msra.mxu0 0.0
    %487 = vmatprep.subr.mxu0 0.0
    %488 = vmatpush2.msra.mxu0 0.0
    %489 = vmatprep.subr.mxu0 0.0
    %490 = vmatpush2.msra.mxu0 0.0
    %491 = vmatprep.mubr.f32.mxu0 0.0
    %v492 = vand.u32 %v41, 4294901760
    %v493 = vsub.f32 %v41, %v492
    %v494 = vand.u32 %v493, 4294901760
    %495 = vmatmul.mubr.f32.gmra.mxu0 %v494
    %v496 = vpop.f32.mrf.mxu0
    %v497 = vadd.f32 %v408, %v496
    %v498 = vpop.f32.mrf.mxu0
    %499 = vdwg.mxu0
    %500 = vmatprep.subr.mxu0 0.0
    %v501 = vand.u32 %v57, 4294901760
    %v502 = vsub.f32 %v57, %v501
    %v503 = vand.u32 %v502, 4294901760
    %504 = vmatpush1.msra.mxu0 %v503
    %505 = vmatprep.subr.mxu0 0.0
    %v506 = vand.u32 %v56, 4294901760
    %v507 = vsub.f32 %v56, %v506
    %v508 = vand.u32 %v507, 4294901760
    %509 = vmatpush1.msra.mxu0 %v508
    %510 = vmatprep.subr.mxu0 0.0
    %v511 = vand.u32 %v55, 4294901760
    %v512 = vsub.f32 %v55, %v511
    %v513 = vand.u32 %v512, 4294901760
    %514 = vmatpush1.msra.mxu0 %v513
    %515 = vmatprep.subr.mxu0 0.0
    %v516 = vand.u32 %v54, 4294901760
    %v517 = vsub.f32 %v54, %v516
    %v518 = vand.u32 %v517, 4294901760
    %519 = vmatpush1.msra.mxu0 %v518
    %520 = vmatprep.subr.mxu0 0.0
    %v521 = vand.u32 %v53, 4294901760
    %v522 = vsub.f32 %v53, %v521
    %v523 = vand.u32 %v522, 4294901760
    %524 = vmatpush1.msra.mxu0 %v523
    %525 = vmatprep.subr.mxu0 0.0
    %v526 = vand.u32 %v52, 4294901760
    %v527 = vsub.f32 %v52, %v526
    %v528 = vand.u32 %v527, 4294901760
    %529 = vmatpush1.msra.mxu0 %v528
    %530 = vmatprep.subr.mxu0 0.0
    %v531 = vand.u32 %v51, 4294901760
    %v532 = vsub.f32 %v51, %v531
    %v533 = vand.u32 %v532, 4294901760
    %534 = vmatpush1.msra.mxu0 %v533
    %535 = vmatprep.subr.mxu0 0.0
    %v536 = vand.u32 %v50, 4294901760
    %v537 = vsub.f32 %v50, %v536
    %v538 = vand.u32 %v537, 4294901760
    %539 = vmatpush1.msra.mxu0 %v538
    %540 = vmatprep.subr.mxu0 0.0
    %v541 = vand.u32 %v49, 4294901760
    %v542 = vsub.f32 %v49, %v541
    %v543 = vand.u32 %v542, 4294901760
    %544 = vmatpush1.msra.mxu0 %v543
    %545 = vmatprep.subr.mxu0 0.0
    %v546 = vand.u32 %v48, 4294901760
    %v547 = vsub.f32 %v48, %v546
    %v548 = vand.u32 %v547, 4294901760
    %549 = vmatpush1.msra.mxu0 %v548
    %550 = vmatprep.subr.mxu0 0.0
    %v551 = vand.u32 %v47, 4294901760
    %v552 = vsub.f32 %v47, %v551
    %v553 = vand.u32 %v552, 4294901760
    %554 = vmatpush1.msra.mxu0 %v553
    %555 = vmatprep.subr.mxu0 0.0
    %v556 = vand.u32 %v46, 4294901760
    %v557 = vsub.f32 %v46, %v556
    %v558 = vand.u32 %v557, 4294901760
    %559 = vmatpush1.msra.mxu0 %v558
    %560 = vmatprep.subr.mxu0 0.0
    %v561 = vand.u32 %v45, 4294901760
    %v562 = vsub.f32 %v45, %v561
    %v563 = vand.u32 %v562, 4294901760
    %564 = vmatpush1.msra.mxu0 %v563
    %565 = vmatprep.subr.mxu0 0.0
    %v566 = vand.u32 %v44, 4294901760
    %v567 = vsub.f32 %v44, %v566
    %v568 = vand.u32 %v567, 4294901760
    %569 = vmatpush1.msra.mxu0 %v568
    %570 = vmatprep.subr.mxu0 0.0
    %v571 = vand.u32 %v43, 4294901760
    %v572 = vsub.f32 %v43, %v571
    %v573 = vand.u32 %v572, 4294901760
    %574 = vmatpush1.msra.mxu0 %v573
    %575 = vmatprep.subr.mxu0 0.0
    %v576 = vand.u32 %v42, 4294901760
    %v577 = vsub.f32 %v42, %v576
    %v578 = vand.u32 %v577, 4294901760
    %579 = vmatpush1.msra.mxu0 %v578
    %580 = vmatprep.subr.mxu0 0.0
    %581 = vmatpush2.msra.mxu0 0.0
    %582 = vmatprep.subr.mxu0 0.0
    %583 = vmatpush2.msra.mxu0 0.0
    %584 = vmatprep.subr.mxu0 0.0
    %585 = vmatpush2.msra.mxu0 0.0
    %586 = vmatprep.subr.mxu0 0.0
    %587 = vmatpush2.msra.mxu0 0.0
    %588 = vmatprep.subr.mxu0 0.0
    %589 = vmatpush2.msra.mxu0 0.0
    %590 = vmatprep.subr.mxu0 0.0
    %591 = vmatpush2.msra.mxu0 0.0
    %592 = vmatprep.subr.mxu0 0.0
    %593 = vmatpush2.msra.mxu0 0.0
    %594 = vmatprep.subr.mxu0 0.0
    %595 = vmatpush2.msra.mxu0 0.0
    %596 = vmatprep.subr.mxu0 0.0
    %597 = vmatpush2.msra.mxu0 0.0
    %598 = vmatprep.subr.mxu0 0.0
    %599 = vmatpush2.msra.mxu0 0.0
    %600 = vmatprep.subr.mxu0 0.0
    %601 = vmatpush2.msra.mxu0 0.0
    %602 = vmatprep.subr.mxu0 0.0
    %603 = vmatpush2.msra.mxu0 0.0
    %604 = vmatprep.subr.mxu0 0.0
    %605 = vmatpush2.msra.mxu0 0.0
    %606 = vmatprep.subr.mxu0 0.0
    %607 = vmatpush2.msra.mxu0 0.0
    %608 = vmatprep.subr.mxu0 0.0
    %609 = vmatpush2.msra.mxu0 0.0
    %610 = vmatprep.subr.mxu0 0.0
    %611 = vmatpush2.msra.mxu0 0.0
    %612 = vmatprep.mubr.f32.mxu0 0.0
    %v613 = vand.u32 %v41, 4294901760
    %614 = vmatmul.mubr.f32.gmra.mxu0 %v613
    %v615 = vpop.f32.mrf.mxu0
    %v616 = vadd.f32 %v497, %v615
    %v617 = vpop.f32.mrf.mxu0
    %618 = vdwg.mxu0
    %619 = vmatprep.subr.mxu0 0.0
    %v620 = vand.u32 %v57, 4294901760
    %621 = vmatpush1.msra.mxu0 %v620
    %622 = vmatprep.subr.mxu0 0.0
    %v623 = vand.u32 %v56, 4294901760
    %624 = vmatpush1.msra.mxu0 %v623
    %625 = vmatprep.subr.mxu0 0.0
    %v626 = vand.u32 %v55, 4294901760
    %627 = vmatpush1.msra.mxu0 %v626
    %628 = vmatprep.subr.mxu0 0.0
    %v629 = vand.u32 %v54, 4294901760
    %630 = vmatpush1.msra.mxu0 %v629
    %631 = vmatprep.subr.mxu0 0.0
    %v632 = vand.u32 %v53, 4294901760
    %633 = vmatpush1.msra.mxu0 %v632
    %634 = vmatprep.subr.mxu0 0.0
    %v635 = vand.u32 %v52, 4294901760
    %636 = vmatpush1.msra.mxu0 %v635
    %637 = vmatprep.subr.mxu0 0.0
    %v638 = vand.u32 %v51, 4294901760
    %639 = vmatpush1.msra.mxu0 %v638
    %640 = vmatprep.subr.mxu0 0.0
    %v641 = vand.u32 %v50, 4294901760
    %642 = vmatpush1.msra.mxu0 %v641
    %643 = vmatprep.subr.mxu0 0.0
    %v644 = vand.u32 %v49, 4294901760
    %645 = vmatpush1.msra.mxu0 %v644
    %646 = vmatprep.subr.mxu0 0.0
    %v647 = vand.u32 %v48, 4294901760
    %648 = vmatpush1.msra.mxu0 %v647
    %649 = vmatprep.subr.mxu0 0.0
    %v650 = vand.u32 %v47, 4294901760
    %651 = vmatpush1.msra.mxu0 %v650
    %652 = vmatprep.subr.mxu0 0.0
    %v653 = vand.u32 %v46, 4294901760
    %654 = vmatpush1.msra.mxu0 %v653
    %655 = vmatprep.subr.mxu0 0.0
    %v656 = vand.u32 %v45, 4294901760
    %657 = vmatpush1.msra.mxu0 %v656
    %658 = vmatprep.subr.mxu0 0.0
    %v659 = vand.u32 %v44, 4294901760
    %660 = vmatpush1.msra.mxu0 %v659
    %661 = vmatprep.subr.mxu0 0.0
    %v662 = vand.u32 %v43, 4294901760
    %663 = vmatpush1.msra.mxu0 %v662
    %664 = vmatprep.subr.mxu0 0.0
    %v665 = vand.u32 %v42, 4294901760
    %666 = vmatpush1.msra.mxu0 %v665
    %667 = vmatprep.subr.mxu0 0.0
    %668 = vmatpush2.msra.mxu0 0.0
    %669 = vmatprep.subr.mxu0 0.0
    %670 = vmatpush2.msra.mxu0 0.0
    %671 = vmatprep.subr.mxu0 0.0
    %672 = vmatpush2.msra.mxu0 0.0
    %673 = vmatprep.subr.mxu0 0.0
    %674 = vmatpush2.msra.mxu0 0.0
    %675 = vmatprep.subr.mxu0 0.0
    %676 = vmatpush2.msra.mxu0 0.0
    %677 = vmatprep.subr.mxu0 0.0
    %678 = vmatpush2.msra.mxu0 0.0
    %679 = vmatprep.subr.mxu0 0.0
    %680 = vmatpush2.msra.mxu0 0.0
    %681 = vmatprep.subr.mxu0 0.0
    %682 = vmatpush2.msra.mxu0 0.0
    %683 = vmatprep.subr.mxu0 0.0
    %684 = vmatpush2.msra.mxu0 0.0
    %685 = vmatprep.subr.mxu0 0.0
    %686 = vmatpush2.msra.mxu0 0.0
    %687 = vmatprep.subr.mxu0 0.0
    %688 = vmatpush2.msra.mxu0 0.0
    %689 = vmatprep.subr.mxu0 0.0
    %690 = vmatpush2.msra.mxu0 0.0
    %691 = vmatprep.subr.mxu0 0.0
    %692 = vmatpush2.msra.mxu0 0.0
    %693 = vmatprep.subr.mxu0 0.0
    %694 = vmatpush2.msra.mxu0 0.0
    %695 = vmatprep.subr.mxu0 0.0
    %696 = vmatpush2.msra.mxu0 0.0
    %697 = vmatprep.subr.mxu0 0.0
    %698 = vmatpush2.msra.mxu0 0.0
    %699 = vmatprep.mubr.f32.mxu0 0.0
    %v700 = vand.u32 %v41, 4294901760
    %701 = vmatmul.mubr.f32.gmra.mxu0 %v700
    %v702 = vpop.f32.mrf.mxu0
    %v703 = vadd.f32 %v616, %v702
    %v704 = vpop.f32.mrf.mxu0
    %705 = vdwg.mxu0
    %v706 = vtanh.pop %v703
    %s707 = scalar_lea.vmem [#allocation5], 128
    %v708 = vld [vmem:[%s707] sm:$0xff]
    %v709 = vld [vmem:[%s707 + $0x8] sm:$0xff]
    %v710 = vld [vmem:[%s707 + $0x10] sm:$0xff]
    %v711 = vld [vmem:[%s707 + $0x18] sm:$0xff]
    %v712 = vld [vmem:[%s707 + $0x20] sm:$0xff]
    %v713 = vld [vmem:[%s707 + $0x28] sm:$0xff]
    %v714 = vld [vmem:[%s707 + $0x30] sm:$0xff]
    %v715 = vld [vmem:[%s707 + $0x38] sm:$0xff]
    %v716 = vld [vmem:[%s707 + $0x40] sm:$0xff]
    %v717 = vld [vmem:[%s707 + $0x48] sm:$0xff]
    %v718 = vld [vmem:[%s707 + $0x50] sm:$0xff]
    %v719 = vld [vmem:[%s707 + $0x58] sm:$0xff]
    %v720 = vld [vmem:[%s707 + $0x60] sm:$0xff]
    %v721 = vld [vmem:[%s707 + $0x68] sm:$0xff]
    %v722 = vld [vmem:[%s707 + $0x70] sm:$0xff]
    %v723 = vld [vmem:[%s707 + $0x78] sm:$0xff]
    %s724 = scalar_lea.vmem %s2, 1
    %v725 = vld [vmem:[%s724] sm:$0x1]
    %v727 = vlaneseq
    %v728 = vshrl.u32 %v727, 7
    %v729 = vsub.s32 0, %v728
    %v730 = vrot.slane %v725, %v729
    %732 = vmatprep.subr.mxu0 0.0
    %v733 = vand.u32 %v723, 4294901760
    %734 = vmatpush1.msra.mxu0 %v733
    %735 = vmatprep.subr.mxu0 0.0
    %v736 = vand.u32 %v722, 4294901760
    %737 = vmatpush1.msra.mxu0 %v736
    %738 = vmatprep.subr.mxu0 0.0
    %v739 = vand.u32 %v721, 4294901760
    %740 = vmatpush1.msra.mxu0 %v739
    %741 = vmatprep.subr.mxu0 0.0
    %v742 = vand.u32 %v720, 4294901760
    %743 = vmatpush1.msra.mxu0 %v742
    %744 = vmatprep.subr.mxu0 0.0
    %v745 = vand.u32 %v719, 4294901760
    %746 = vmatpush1.msra.mxu0 %v745
    %747 = vmatprep.subr.mxu0 0.0
    %v748 = vand.u32 %v718, 4294901760
    %749 = vmatpush1.msra.mxu0 %v748
    %750 = vmatprep.subr.mxu0 0.0
    %v751 = vand.u32 %v717, 4294901760
    %752 = vmatpush1.msra.mxu0 %v751
    %753 = vmatprep.subr.mxu0 0.0
    %v754 = vand.u32 %v716, 4294901760
    %755 = vmatpush1.msra.mxu0 %v754
    %756 = vmatprep.subr.mxu0 0.0
    %v757 = vand.u32 %v715, 4294901760
    %758 = vmatpush1.msra.mxu0 %v757
    %759 = vmatprep.subr.mxu0 0.0
    %v760 = vand.u32 %v714, 4294901760
    %761 = vmatpush1.msra.mxu0 %v760
    %762 = vmatprep.subr.mxu0 0.0
    %v763 = vand.u32 %v713, 4294901760
    %764 = vmatpush1.msra.mxu0 %v763
    %765 = vmatprep.subr.mxu0 0.0
    %v766 = vand.u32 %v712, 4294901760
    %767 = vmatpush1.msra.mxu0 %v766
    %768 = vmatprep.subr.mxu0 0.0
    %v769 = vand.u32 %v711, 4294901760
    %770 = vmatpush1.msra.mxu0 %v769
    %771 = vmatprep.subr.mxu0 0.0
    %v772 = vand.u32 %v710, 4294901760
    %773 = vmatpush1.msra.mxu0 %v772
    %774 = vmatprep.subr.mxu0 0.0
    %v775 = vand.u32 %v709, 4294901760
    %776 = vmatpush1.msra.mxu0 %v775
    %777 = vmatprep.subr.mxu0 0.0
    %v778 = vand.u32 %v708, 4294901760
    %779 = vmatpush1.msra.mxu0 %v778
    %780 = vmatprep.subr.mxu0 0.0
    %781 = vmatpush2.msra.mxu0 0.0
    %782 = vmatprep.subr.mxu0 0.0
    %783 = vmatpush2.msra.mxu0 0.0
    %784 = vmatprep.subr.mxu0 0.0
    %785 = vmatpush2.msra.mxu0 0.0
    %786 = vmatprep.subr.mxu0 0.0
    %787 = vmatpush2.msra.mxu0 0.0
    %788 = vmatprep.subr.mxu0 0.0
    %789 = vmatpush2.msra.mxu0 0.0
    %790 = vmatprep.subr.mxu0 0.0
    %791 = vmatpush2.msra.mxu0 0.0
    %792 = vmatprep.subr.mxu0 0.0
    %793 = vmatpush2.msra.mxu0 0.0
    %794 = vmatprep.subr.mxu0 0.0
    %795 = vmatpush2.msra.mxu0 0.0
    %796 = vmatprep.subr.mxu0 0.0
    %797 = vmatpush2.msra.mxu0 0.0
    %798 = vmatprep.subr.mxu0 0.0
    %799 = vmatpush2.msra.mxu0 0.0
    %800 = vmatprep.subr.mxu0 0.0
    %801 = vmatpush2.msra.mxu0 0.0
    %802 = vmatprep.subr.mxu0 0.0
    %803 = vmatpush2.msra.mxu0 0.0
    %804 = vmatprep.subr.mxu0 0.0
    %805 = vmatpush2.msra.mxu0 0.0
    %806 = vmatprep.subr.mxu0 0.0
    %807 = vmatpush2.msra.mxu0 0.0
    %808 = vmatprep.subr.mxu0 0.0
    %809 = vmatpush2.msra.mxu0 0.0
    %810 = vmatprep.subr.mxu0 0.0
    %811 = vmatpush2.msra.mxu0 0.0
    %812 = vmatprep.mubr.f32.mxu0 0.0
    %v813 = vand.u32 %v706, 4294901760
    %v814 = vsub.f32 %v706, %v813
    %v815 = vand.u32 %v814, 4294901760
    %v816 = vsub.f32 %v814, %v815
    %v817 = vand.u32 %v816, 4294901760
    %818 = vmatmul.mubr.f32.gmra.mxu0 %v817
    %v819 = vpop.f32.mrf.mxu0
    %v820 = vadd.f32 %v730, %v819
    %v821 = vpop.f32.mrf.mxu0
    %822 = vdwg.mxu0
    %823 = vmatprep.subr.mxu0 0.0
    %v824 = vand.u32 %v723, 4294901760
    %v825 = vsub.f32 %v723, %v824
    %v826 = vand.u32 %v825, 4294901760
    %v827 = vsub.f32 %v825, %v826
    %v828 = vand.u32 %v827, 4294901760
    %829 = vmatpush1.msra.mxu0 %v828
    %830 = vmatprep.subr.mxu0 0.0
    %v831 = vand.u32 %v722, 4294901760
    %v832 = vsub.f32 %v722, %v831
    %v833 = vand.u32 %v832, 4294901760
    %v834 = vsub.f32 %v832, %v833
    %v835 = vand.u32 %v834, 4294901760
    %836 = vmatpush1.msra.mxu0 %v835
    %837 = vmatprep.subr.mxu0 0.0
    %v838 = vand.u32 %v721, 4294901760
    %v839 = vsub.f32 %v721, %v838
    %v840 = vand.u32 %v839, 4294901760
    %v841 = vsub.f32 %v839, %v840
    %v842 = vand.u32 %v841, 4294901760
    %843 = vmatpush1.msra.mxu0 %v842
    %844 = vmatprep.subr.mxu0 0.0
    %v845 = vand.u32 %v720, 4294901760
    %v846 = vsub.f32 %v720, %v845
    %v847 = vand.u32 %v846, 4294901760
    %v848 = vsub.f32 %v846, %v847
    %v849 = vand.u32 %v848, 4294901760
    %850 = vmatpush1.msra.mxu0 %v849
    %851 = vmatprep.subr.mxu0 0.0
    %v852 = vand.u32 %v719, 4294901760
    %v853 = vsub.f32 %v719, %v852
    %v854 = vand.u32 %v853, 4294901760
    %v855 = vsub.f32 %v853, %v854
    %v856 = vand.u32 %v855, 4294901760
    %857 = vmatpush1.msra.mxu0 %v856
    %858 = vmatprep.subr.mxu0 0.0
    %v859 = vand.u32 %v718, 4294901760
    %v860 = vsub.f32 %v718, %v859
    %v861 = vand.u32 %v860, 4294901760
    %v862 = vsub.f32 %v860, %v861
    %v863 = vand.u32 %v862, 4294901760
    %864 = vmatpush1.msra.mxu0 %v863
    %865 = vmatprep.subr.mxu0 0.0
    %v866 = vand.u32 %v717, 4294901760
    %v867 = vsub.f32 %v717, %v866
    %v868 = vand.u32 %v867, 4294901760
    %v869 = vsub.f32 %v867, %v868
    %v870 = vand.u32 %v869, 4294901760
    %871 = vmatpush1.msra.mxu0 %v870
    %872 = vmatprep.subr.mxu0 0.0
    %v873 = vand.u32 %v716, 4294901760
    %v874 = vsub.f32 %v716, %v873
    %v875 = vand.u32 %v874, 4294901760
    %v876 = vsub.f32 %v874, %v875
    %v877 = vand.u32 %v876, 4294901760
    %878 = vmatpush1.msra.mxu0 %v877
    %879 = vmatprep.subr.mxu0 0.0
    %v880 = vand.u32 %v715, 4294901760
    %v881 = vsub.f32 %v715, %v880
    %v882 = vand.u32 %v881, 4294901760
    %v883 = vsub.f32 %v881, %v882
    %v884 = vand.u32 %v883, 4294901760
    %885 = vmatpush1.msra.mxu0 %v884
    %886 = vmatprep.subr.mxu0 0.0
    %v887 = vand.u32 %v714, 4294901760
    %v888 = vsub.f32 %v714, %v887
    %v889 = vand.u32 %v888, 4294901760
    %v890 = vsub.f32 %v888, %v889
    %v891 = vand.u32 %v890, 4294901760
    %892 = vmatpush1.msra.mxu0 %v891
    %893 = vmatprep.subr.mxu0 0.0
    %v894 = vand.u32 %v713, 4294901760
    %v895 = vsub.f32 %v713, %v894
    %v896 = vand.u32 %v895, 4294901760
    %v897 = vsub.f32 %v895, %v896
    %v898 = vand.u32 %v897, 4294901760
    %899 = vmatpush1.msra.mxu0 %v898
    %900 = vmatprep.subr.mxu0 0.0
    %v901 = vand.u32 %v712, 4294901760
    %v902 = vsub.f32 %v712, %v901
    %v903 = vand.u32 %v902, 4294901760
    %v904 = vsub.f32 %v902, %v903
    %v905 = vand.u32 %v904, 4294901760
    %906 = vmatpush1.msra.mxu0 %v905
    %907 = vmatprep.subr.mxu0 0.0
    %v908 = vand.u32 %v711, 4294901760
    %v909 = vsub.f32 %v711, %v908
    %v910 = vand.u32 %v909, 4294901760
    %v911 = vsub.f32 %v909, %v910
    %v912 = vand.u32 %v911, 4294901760
    %913 = vmatpush1.msra.mxu0 %v912
    %914 = vmatprep.subr.mxu0 0.0
    %v915 = vand.u32 %v710, 4294901760
    %v916 = vsub.f32 %v710, %v915
    %v917 = vand.u32 %v916, 4294901760
    %v918 = vsub.f32 %v916, %v917
    %v919 = vand.u32 %v918, 4294901760
    %920 = vmatpush1.msra.mxu0 %v919
    %921 = vmatprep.subr.mxu0 0.0
    %v922 = vand.u32 %v709, 4294901760
    %v923 = vsub.f32 %v709, %v922
    %v924 = vand.u32 %v923, 4294901760
    %v925 = vsub.f32 %v923, %v924
    %v926 = vand.u32 %v925, 4294901760
    %927 = vmatpush1.msra.mxu0 %v926
    %928 = vmatprep.subr.mxu0 0.0
    %v929 = vand.u32 %v708, 4294901760
    %v930 = vsub.f32 %v708, %v929
    %v931 = vand.u32 %v930, 4294901760
    %v932 = vsub.f32 %v930, %v931
    %v933 = vand.u32 %v932, 4294901760
    %934 = vmatpush1.msra.mxu0 %v933
    %935 = vmatprep.subr.mxu0 0.0
    %936 = vmatpush2.msra.mxu0 0.0
    %937 = vmatprep.subr.mxu0 0.0
    %938 = vmatpush2.msra.mxu0 0.0
    %939 = vmatprep.subr.mxu0 0.0
    %940 = vmatpush2.msra.mxu0 0.0
    %941 = vmatprep.subr.mxu0 0.0
    %942 = vmatpush2.msra.mxu0 0.0
    %943 = vmatprep.subr.mxu0 0.0
    %944 = vmatpush2.msra.mxu0 0.0
    %945 = vmatprep.subr.mxu0 0.0
    %946 = vmatpush2.msra.mxu0 0.0
    %947 = vmatprep.subr.mxu0 0.0
    %948 = vmatpush2.msra.mxu0 0.0
    %949 = vmatprep.subr.mxu0 0.0
    %950 = vmatpush2.msra.mxu0 0.0
    %951 = vmatprep.subr.mxu0 0.0
    %952 = vmatpush2.msra.mxu0 0.0
    %953 = vmatprep.subr.mxu0 0.0
    %954 = vmatpush2.msra.mxu0 0.0
    %955 = vmatprep.subr.mxu0 0.0
    %956 = vmatpush2.msra.mxu0 0.0
    %957 = vmatprep.subr.mxu0 0.0
    %958 = vmatpush2.msra.mxu0 0.0
    %959 = vmatprep.subr.mxu0 0.0
    %960 = vmatpush2.msra.mxu0 0.0
    %961 = vmatprep.subr.mxu0 0.0
    %962 = vmatpush2.msra.mxu0 0.0
    %963 = vmatprep.subr.mxu0 0.0
    %964 = vmatpush2.msra.mxu0 0.0
    %965 = vmatprep.subr.mxu0 0.0
    %966 = vmatpush2.msra.mxu0 0.0
    %967 = vmatprep.mubr.f32.mxu0 0.0
    %v968 = vand.u32 %v706, 4294901760
    %969 = vmatmul.mubr.f32.gmra.mxu0 %v968
    %v970 = vpop.f32.mrf.mxu0
    %v971 = vadd.f32 %v820, %v970
    %v972 = vpop.f32.mrf.mxu0
    %973 = vdwg.mxu0
    %974 = vmatprep.subr.mxu0 0.0
    %v975 = vand.u32 %v723, 4294901760
    %v976 = vsub.f32 %v723, %v975
    %977 = vmatpush1.msra.mxu0 %v976
    %978 = vmatprep.subr.mxu0 0.0
    %v979 = vand.u32 %v722, 4294901760
    %v980 = vsub.f32 %v722, %v979
    %981 = vmatpush1.msra.mxu0 %v980
    %982 = vmatprep.subr.mxu0 0.0
    %v983 = vand.u32 %v721, 4294901760
    %v984 = vsub.f32 %v721, %v983
    %985 = vmatpush1.msra.mxu0 %v984
    %986 = vmatprep.subr.mxu0 0.0
    %v987 = vand.u32 %v720, 4294901760
    %v988 = vsub.f32 %v720, %v987
    %989 = vmatpush1.msra.mxu0 %v988
    %990 = vmatprep.subr.mxu0 0.0
    %v991 = vand.u32 %v719, 4294901760
    %v992 = vsub.f32 %v719, %v991
    %993 = vmatpush1.msra.mxu0 %v992
    %994 = vmatprep.subr.mxu0 0.0
    %v995 = vand.u32 %v718, 4294901760
    %v996 = vsub.f32 %v718, %v995
    %997 = vmatpush1.msra.mxu0 %v996
    %998 = vmatprep.subr.mxu0 0.0
    %v999 = vand.u32 %v717, 4294901760
    %v1000 = vsub.f32 %v717, %v999
    %1001 = vmatpush1.msra.mxu0 %v1000
    %1002 = vmatprep.subr.mxu0 0.0
    %v1003 = vand.u32 %v716, 4294901760
    %v1004 = vsub.f32 %v716, %v1003
    %1005 = vmatpush1.msra.mxu0 %v1004
    %1006 = vmatprep.subr.mxu0 0.0
    %v1007 = vand.u32 %v715, 4294901760
    %v1008 = vsub.f32 %v715, %v1007
    %1009 = vmatpush1.msra.mxu0 %v1008
    %1010 = vmatprep.subr.mxu0 0.0
    %v1011 = vand.u32 %v714, 4294901760
    %v1012 = vsub.f32 %v714, %v1011
    %1013 = vmatpush1.msra.mxu0 %v1012
    %1014 = vmatprep.subr.mxu0 0.0
    %v1015 = vand.u32 %v713, 4294901760
    %v1016 = vsub.f32 %v713, %v1015
    %1017 = vmatpush1.msra.mxu0 %v1016
    %1018 = vmatprep.subr.mxu0 0.0
    %v1019 = vand.u32 %v712, 4294901760
    %v1020 = vsub.f32 %v712, %v1019
    %1021 = vmatpush1.msra.mxu0 %v1020
    %1022 = vmatprep.subr.mxu0 0.0
    %v1023 = vand.u32 %v711, 4294901760
    %v1024 = vsub.f32 %v711, %v1023
    %1025 = vmatpush1.msra.mxu0 %v1024
    %1026 = vmatprep.subr.mxu0 0.0
    %v1027 = vand.u32 %v710, 4294901760
    %v1028 = vsub.f32 %v710, %v1027
    %1029 = vmatpush1.msra.mxu0 %v1028
    %1030 = vmatprep.subr.mxu0 0.0
    %v1031 = vand.u32 %v709, 4294901760
    %v1032 = vsub.f32 %v709, %v1031
    %1033 = vmatpush1.msra.mxu0 %v1032
    %1034 = vmatprep.subr.mxu0 0.0
    %v1035 = vand.u32 %v708, 4294901760
    %v1036 = vsub.f32 %v708, %v1035
    %1037 = vmatpush1.msra.mxu0 %v1036
    %1038 = vmatprep.subr.mxu0 0.0
    %1039 = vmatpush2.msra.mxu0 0.0
    %1040 = vmatprep.subr.mxu0 0.0
    %1041 = vmatpush2.msra.mxu0 0.0
    %1042 = vmatprep.subr.mxu0 0.0
    %1043 = vmatpush2.msra.mxu0 0.0
    %1044 = vmatprep.subr.mxu0 0.0
    %1045 = vmatpush2.msra.mxu0 0.0
    %1046 = vmatprep.subr.mxu0 0.0
    %1047 = vmatpush2.msra.mxu0 0.0
    %1048 = vmatprep.subr.mxu0 0.0
    %1049 = vmatpush2.msra.mxu0 0.0
    %1050 = vmatprep.subr.mxu0 0.0
    %1051 = vmatpush2.msra.mxu0 0.0
    %1052 = vmatprep.subr.mxu0 0.0
    %1053 = vmatpush2.msra.mxu0 0.0
    %1054 = vmatprep.subr.mxu0 0.0
    %1055 = vmatpush2.msra.mxu0 0.0
    %1056 = vmatprep.subr.mxu0 0.0
    %1057 = vmatpush2.msra.mxu0 0.0
    %1058 = vmatprep.subr.mxu0 0.0
    %1059 = vmatpush2.msra.mxu0 0.0
    %1060 = vmatprep.subr.mxu0 0.0
    %1061 = vmatpush2.msra.mxu0 0.0
    %1062 = vmatprep.subr.mxu0 0.0
    %1063 = vmatpush2.msra.mxu0 0.0
    %1064 = vmatprep.subr.mxu0 0.0
    %1065 = vmatpush2.msra.mxu0 0.0
    %1066 = vmatprep.subr.mxu0 0.0
    %1067 = vmatpush2.msra.mxu0 0.0
    %1068 = vmatprep.subr.mxu0 0.0
    %1069 = vmatpush2.msra.mxu0 0.0
    %1070 = vmatprep.mubr.f32.mxu0 0.0
    %v1071 = vand.u32 %v706, 4294901760
    %v1072 = vsub.f32 %v706, %v1071
    %1073 = vmatmul.mubr.f32.gmra.mxu0 %v1072
    %v1074 = vpop.f32.mrf.mxu0
    %v1075 = vadd.f32 %v971, %v1074
    %v1076 = vpop.f32.mrf.mxu0
    %1077 = vdwg.mxu0
    %1078 = vmatprep.subr.mxu0 0.0
    %v1079 = vand.u32 %v723, 4294901760
    %1080 = vmatpush1.msra.mxu0 %v1079
    %1081 = vmatprep.subr.mxu0 0.0
    %v1082 = vand.u32 %v722, 4294901760
    %1083 = vmatpush1.msra.mxu0 %v1082
    %1084 = vmatprep.subr.mxu0 0.0
    %v1085 = vand.u32 %v721, 4294901760
    %1086 = vmatpush1.msra.mxu0 %v1085
    %1087 = vmatprep.subr.mxu0 0.0
    %v1088 = vand.u32 %v720, 4294901760
    %1089 = vmatpush1.msra.mxu0 %v1088
    %1090 = vmatprep.subr.mxu0 0.0
    %v1091 = vand.u32 %v719, 4294901760
    %1092 = vmatpush1.msra.mxu0 %v1091
    %1093 = vmatprep.subr.mxu0 0.0
    %v1094 = vand.u32 %v718, 4294901760
    %1095 = vmatpush1.msra.mxu0 %v1094
    %1096 = vmatprep.subr.mxu0 0.0
    %v1097 = vand.u32 %v717, 4294901760
    %1098 = vmatpush1.msra.mxu0 %v1097
    %1099 = vmatprep.subr.mxu0 0.0
    %v1100 = vand.u32 %v716, 4294901760
    %1101 = vmatpush1.msra.mxu0 %v1100
    %1102 = vmatprep.subr.mxu0 0.0
    %v1103 = vand.u32 %v715, 4294901760
    %1104 = vmatpush1.msra.mxu0 %v1103
    %1105 = vmatprep.subr.mxu0 0.0
    %v1106 = vand.u32 %v714, 4294901760
    %1107 = vmatpush1.msra.mxu0 %v1106
    %1108 = vmatprep.subr.mxu0 0.0
    %v1109 = vand.u32 %v713, 4294901760
    %1110 = vmatpush1.msra.mxu0 %v1109
    %1111 = vmatprep.subr.mxu0 0.0
    %v1112 = vand.u32 %v712, 4294901760
    %1113 = vmatpush1.msra.mxu0 %v1112
    %1114 = vmatprep.subr.mxu0 0.0
    %v1115 = vand.u32 %v711, 4294901760
    %1116 = vmatpush1.msra.mxu0 %v1115
    %1117 = vmatprep.subr.mxu0 0.0
    %v1118 = vand.u32 %v710, 4294901760
    %1119 = vmatpush1.msra.mxu0 %v1118
    %1120 = vmatprep.subr.mxu0 0.0
    %v1121 = vand.u32 %v709, 4294901760
    %1122 = vmatpush1.msra.mxu0 %v1121
    %1123 = vmatprep.subr.mxu0 0.0
    %v1124 = vand.u32 %v708, 4294901760
    %1125 = vmatpush1.msra.mxu0 %v1124
    %1126 = vmatprep.subr.mxu0 0.0
    %1127 = vmatpush2.msra.mxu0 0.0
    %1128 = vmatprep.subr.mxu0 0.0
    %1129 = vmatpush2.msra.mxu0 0.0
    %1130 = vmatprep.subr.mxu0 0.0
    %1131 = vmatpush2.msra.mxu0 0.0
    %1132 = vmatprep.subr.mxu0 0.0
    %1133 = vmatpush2.msra.mxu0 0.0
    %1134 = vmatprep.subr.mxu0 0.0
    %1135 = vmatpush2.msra.mxu0 0.0
    %1136 = vmatprep.subr.mxu0 0.0
    %1137 = vmatpush2.msra.mxu0 0.0
    %1138 = vmatprep.subr.mxu0 0.0
    %1139 = vmatpush2.msra.mxu0 0.0
    %1140 = vmatprep.subr.mxu0 0.0
    %1141 = vmatpush2.msra.mxu0 0.0
    %1142 = vmatprep.subr.mxu0 0.0
    %1143 = vmatpush2.msra.mxu0 0.0
    %1144 = vmatprep.subr.mxu0 0.0
    %1145 = vmatpush2.msra.mxu0 0.0
    %1146 = vmatprep.subr.mxu0 0.0
    %1147 = vmatpush2.msra.mxu0 0.0
    %1148 = vmatprep.subr.mxu0 0.0
    %1149 = vmatpush2.msra.mxu0 0.0
    %1150 = vmatprep.subr.mxu0 0.0
    %1151 = vmatpush2.msra.mxu0 0.0
    %1152 = vmatprep.subr.mxu0 0.0
    %1153 = vmatpush2.msra.mxu0 0.0
    %1154 = vmatprep.subr.mxu0 0.0
    %1155 = vmatpush2.msra.mxu0 0.0
    %1156 = vmatprep.subr.mxu0 0.0
    %1157 = vmatpush2.msra.mxu0 0.0
    %1158 = vmatprep.mubr.f32.mxu0 0.0
    %v1159 = vand.u32 %v706, 4294901760
    %v1160 = vsub.f32 %v706, %v1159
    %v1161 = vand.u32 %v1160, 4294901760
    %1162 = vmatmul.mubr.f32.gmra.mxu0 %v1161
    %v1163 = vpop.f32.mrf.mxu0
    %v1164 = vadd.f32 %v1075, %v1163
    %v1165 = vpop.f32.mrf.mxu0
    %1166 = vdwg.mxu0
    %1167 = vmatprep.subr.mxu0 0.0
    %v1168 = vand.u32 %v723, 4294901760
    %v1169 = vsub.f32 %v723, %v1168
    %v1170 = vand.u32 %v1169, 4294901760
    %1171 = vmatpush1.msra.mxu0 %v1170
    %1172 = vmatprep.subr.mxu0 0.0
    %v1173 = vand.u32 %v722, 4294901760
    %v1174 = vsub.f32 %v722, %v1173
    %v1175 = vand.u32 %v1174, 4294901760
    %1176 = vmatpush1.msra.mxu0 %v1175
    %1177 = vmatprep.subr.mxu0 0.0
    %v1178 = vand.u32 %v721, 4294901760
    %v1179 = vsub.f32 %v721, %v1178
    %v1180 = vand.u32 %v1179, 4294901760
    %1181 = vmatpush1.msra.mxu0 %v1180
    %1182 = vmatprep.subr.mxu0 0.0
    %v1183 = vand.u32 %v720, 4294901760
    %v1184 = vsub.f32 %v720, %v1183
    %v1185 = vand.u32 %v1184, 4294901760
    %1186 = vmatpush1.msra.mxu0 %v1185
    %1187 = vmatprep.subr.mxu0 0.0
    %v1188 = vand.u32 %v719, 4294901760
    %v1189 = vsub.f32 %v719, %v1188
    %v1190 = vand.u32 %v1189, 4294901760
    %1191 = vmatpush1.msra.mxu0 %v1190
    %1192 = vmatprep.subr.mxu0 0.0
    %v1193 = vand.u32 %v718, 4294901760
    %v1194 = vsub.f32 %v718, %v1193
    %v1195 = vand.u32 %v1194, 4294901760
    %1196 = vmatpush1.msra.mxu0 %v1195
    %1197 = vmatprep.subr.mxu0 0.0
    %v1198 = vand.u32 %v717, 4294901760
    %v1199 = vsub.f32 %v717, %v1198
    %v1200 = vand.u32 %v1199, 4294901760
    %1201 = vmatpush1.msra.mxu0 %v1200
    %1202 = vmatprep.subr.mxu0 0.0
    %v1203 = vand.u32 %v716, 4294901760
    %v1204 = vsub.f32 %v716, %v1203
    %v1205 = vand.u32 %v1204, 4294901760
    %1206 = vmatpush1.msra.mxu0 %v1205
    %1207 = vmatprep.subr.mxu0 0.0
    %v1208 = vand.u32 %v715, 4294901760
    %v1209 = vsub.f32 %v715, %v1208
    %v1210 = vand.u32 %v1209, 4294901760
    %1211 = vmatpush1.msra.mxu0 %v1210
    %1212 = vmatprep.subr.mxu0 0.0
    %v1213 = vand.u32 %v714, 4294901760
    %v1214 = vsub.f32 %v714, %v1213
    %v1215 = vand.u32 %v1214, 4294901760
    %1216 = vmatpush1.msra.mxu0 %v1215
    %1217 = vmatprep.subr.mxu0 0.0
    %v1218 = vand.u32 %v713, 4294901760
    %v1219 = vsub.f32 %v713, %v1218
    %v1220 = vand.u32 %v1219, 4294901760
    %1221 = vmatpush1.msra.mxu0 %v1220
    %1222 = vmatprep.subr.mxu0 0.0
    %v1223 = vand.u32 %v712, 4294901760
    %v1224 = vsub.f32 %v712, %v1223
    %v1225 = vand.u32 %v1224, 4294901760
    %1226 = vmatpush1.msra.mxu0 %v1225
    %1227 = vmatprep.subr.mxu0 0.0
    %v1228 = vand.u32 %v711, 4294901760
    %v1229 = vsub.f32 %v711, %v1228
    %v1230 = vand.u32 %v1229, 4294901760
    %1231 = vmatpush1.msra.mxu0 %v1230
    %1232 = vmatprep.subr.mxu0 0.0
    %v1233 = vand.u32 %v710, 4294901760
    %v1234 = vsub.f32 %v710, %v1233
    %v1235 = vand.u32 %v1234, 4294901760
    %1236 = vmatpush1.msra.mxu0 %v1235
    %1237 = vmatprep.subr.mxu0 0.0
    %v1238 = vand.u32 %v709, 4294901760
    %v1239 = vsub.f32 %v709, %v1238
    %v1240 = vand.u32 %v1239, 4294901760
    %1241 = vmatpush1.msra.mxu0 %v1240
    %1242 = vmatprep.subr.mxu0 0.0
    %v1243 = vand.u32 %v708, 4294901760
    %v1244 = vsub.f32 %v708, %v1243
    %v1245 = vand.u32 %v1244, 4294901760
    %1246 = vmatpush1.msra.mxu0 %v1245
    %1247 = vmatprep.subr.mxu0 0.0
    %1248 = vmatpush2.msra.mxu0 0.0
    %1249 = vmatprep.subr.mxu0 0.0
    %1250 = vmatpush2.msra.mxu0 0.0
    %1251 = vmatprep.subr.mxu0 0.0
    %1252 = vmatpush2.msra.mxu0 0.0
    %1253 = vmatprep.subr.mxu0 0.0
    %1254 = vmatpush2.msra.mxu0 0.0
    %1255 = vmatprep.subr.mxu0 0.0
    %1256 = vmatpush2.msra.mxu0 0.0
    %1257 = vmatprep.subr.mxu0 0.0
    %1258 = vmatpush2.msra.mxu0 0.0
    %1259 = vmatprep.subr.mxu0 0.0
    %1260 = vmatpush2.msra.mxu0 0.0
    %1261 = vmatprep.subr.mxu0 0.0
    %1262 = vmatpush2.msra.mxu0 0.0
    %1263 = vmatprep.subr.mxu0 0.0
    %1264 = vmatpush2.msra.mxu0 0.0
    %1265 = vmatprep.subr.mxu0 0.0
    %1266 = vmatpush2.msra.mxu0 0.0
    %1267 = vmatprep.subr.mxu0 0.0
    %1268 = vmatpush2.msra.mxu0 0.0
    %1269 = vmatprep.subr.mxu0 0.0
    %1270 = vmatpush2.msra.mxu0 0.0
    %1271 = vmatprep.subr.mxu0 0.0
    %1272 = vmatpush2.msra.mxu0 0.0
    %1273 = vmatprep.subr.mxu0 0.0
    %1274 = vmatpush2.msra.mxu0 0.0
    %1275 = vmatprep.subr.mxu0 0.0
    %1276 = vmatpush2.msra.mxu0 0.0
    %1277 = vmatprep.subr.mxu0 0.0
    %1278 = vmatpush2.msra.mxu0 0.0
    %1279 = vmatprep.mubr.f32.mxu0 0.0
    %v1280 = vand.u32 %v706, 4294901760
    %1281 = vmatmul.mubr.f32.gmra.mxu0 %v1280
    %v1282 = vpop.f32.mrf.mxu0
    %v1283 = vadd.f32 %v1164, %v1282
    %v1284 = vpop.f32.mrf.mxu0
    %1285 = vdwg.mxu0
    %1286 = vmatprep.subr.mxu0 0.0
    %v1287 = vand.u32 %v723, 4294901760
    %1288 = vmatpush1.msra.mxu0 %v1287
    %1289 = vmatprep.subr.mxu0 0.0
    %v1290 = vand.u32 %v722, 4294901760
    %1291 = vmatpush1.msra.mxu0 %v1290
    %1292 = vmatprep.subr.mxu0 0.0
    %v1293 = vand.u32 %v721, 4294901760
    %1294 = vmatpush1.msra.mxu0 %v1293
    %1295 = vmatprep.subr.mxu0 0.0
    %v1296 = vand.u32 %v720, 4294901760
    %1297 = vmatpush1.msra.mxu0 %v1296
    %1298 = vmatprep.subr.mxu0 0.0
    %v1299 = vand.u32 %v719, 4294901760
    %1300 = vmatpush1.msra.mxu0 %v1299
    %1301 = vmatprep.subr.mxu0 0.0
    %v1302 = vand.u32 %v718, 4294901760
    %1303 = vmatpush1.msra.mxu0 %v1302
    %1304 = vmatprep.subr.mxu0 0.0
    %v1305 = vand.u32 %v717, 4294901760
    %1306 = vmatpush1.msra.mxu0 %v1305
    %1307 = vmatprep.subr.mxu0 0.0
    %v1308 = vand.u32 %v716, 4294901760
    %1309 = vmatpush1.msra.mxu0 %v1308
    %1310 = vmatprep.subr.mxu0 0.0
    %v1311 = vand.u32 %v715, 4294901760
    %1312 = vmatpush1.msra.mxu0 %v1311
    %1313 = vmatprep.subr.mxu0 0.0
    %v1314 = vand.u32 %v714, 4294901760
    %1315 = vmatpush1.msra.mxu0 %v1314
    %1316 = vmatprep.subr.mxu0 0.0
    %v1317 = vand.u32 %v713, 4294901760
    %1318 = vmatpush1.msra.mxu0 %v1317
    %1319 = vmatprep.subr.mxu0 0.0
    %v1320 = vand.u32 %v712, 4294901760
    %1321 = vmatpush1.msra.mxu0 %v1320
    %1322 = vmatprep.subr.mxu0 0.0
    %v1323 = vand.u32 %v711, 4294901760
    %1324 = vmatpush1.msra.mxu0 %v1323
    %1325 = vmatprep.subr.mxu0 0.0
    %v1326 = vand.u32 %v710, 4294901760
    %1327 = vmatpush1.msra.mxu0 %v1326
    %1328 = vmatprep.subr.mxu0 0.0
    %v1329 = vand.u32 %v709, 4294901760
    %1330 = vmatpush1.msra.mxu0 %v1329
    %1331 = vmatprep.subr.mxu0 0.0
    %v1332 = vand.u32 %v708, 4294901760
    %1333 = vmatpush1.msra.mxu0 %v1332
    %1334 = vmatprep.subr.mxu0 0.0
    %1335 = vmatpush2.msra.mxu0 0.0
    %1336 = vmatprep.subr.mxu0 0.0
    %1337 = vmatpush2.msra.mxu0 0.0
    %1338 = vmatprep.subr.mxu0 0.0
    %1339 = vmatpush2.msra.mxu0 0.0
    %1340 = vmatprep.subr.mxu0 0.0
    %1341 = vmatpush2.msra.mxu0 0.0
    %1342 = vmatprep.subr.mxu0 0.0
    %1343 = vmatpush2.msra.mxu0 0.0
    %1344 = vmatprep.subr.mxu0 0.0
    %1345 = vmatpush2.msra.mxu0 0.0
    %1346 = vmatprep.subr.mxu0 0.0
    %1347 = vmatpush2.msra.mxu0 0.0
    %1348 = vmatprep.subr.mxu0 0.0
    %1349 = vmatpush2.msra.mxu0 0.0
    %1350 = vmatprep.subr.mxu0 0.0
    %1351 = vmatpush2.msra.mxu0 0.0
    %1352 = vmatprep.subr.mxu0 0.0
    %1353 = vmatpush2.msra.mxu0 0.0
    %1354 = vmatprep.subr.mxu0 0.0
    %1355 = vmatpush2.msra.mxu0 0.0
    %1356 = vmatprep.subr.mxu0 0.0
    %1357 = vmatpush2.msra.mxu0 0.0
    %1358 = vmatprep.subr.mxu0 0.0
    %1359 = vmatpush2.msra.mxu0 0.0
    %1360 = vmatprep.subr.mxu0 0.0
    %1361 = vmatpush2.msra.mxu0 0.0
    %1362 = vmatprep.subr.mxu0 0.0
    %1363 = vmatpush2.msra.mxu0 0.0
    %1364 = vmatprep.subr.mxu0 0.0
    %1365 = vmatpush2.msra.mxu0 0.0
    %1366 = vmatprep.mubr.f32.mxu0 0.0
    %v1367 = vand.u32 %v706, 4294901760
    %1368 = vmatmul.mubr.f32.gmra.mxu0 %v1367
    %v1369 = vpop.f32.mrf.mxu0
    %v1370 = vadd.f32 %v1283, %v1369
    %v1371 = vpop.f32.mrf.mxu0
    %1372 = vdwg.mxu0
    %v1373 = vtanh.pop %v1370
    %s1374 = scalar_lea.vmem [#allocation5], 256
    %v1375 = vld [vmem:[%s1374] sm:$0xff]
    %v1376 = vld [vmem:[%s1374 + $0x8] sm:$0xff]
    %v1377 = vld [vmem:[%s1374 + $0x10] sm:$0xff]
    %v1378 = vld [vmem:[%s1374 + $0x18] sm:$0xff]
    %v1379 = vld [vmem:[%s1374 + $0x20] sm:$0xff]
    %v1380 = vld [vmem:[%s1374 + $0x28] sm:$0xff]
    %v1381 = vld [vmem:[%s1374 + $0x30] sm:$0xff]
    %v1382 = vld [vmem:[%s1374 + $0x38] sm:$0xff]
    %v1383 = vld [vmem:[%s1374 + $0x40] sm:$0xff]
    %v1384 = vld [vmem:[%s1374 + $0x48] sm:$0xff]
    %v1385 = vld [vmem:[%s1374 + $0x50] sm:$0xff]
    %v1386 = vld [vmem:[%s1374 + $0x58] sm:$0xff]
    %v1387 = vld [vmem:[%s1374 + $0x60] sm:$0xff]
    %v1388 = vld [vmem:[%s1374 + $0x68] sm:$0xff]
    %v1389 = vld [vmem:[%s1374 + $0x70] sm:$0xff]
    %v1390 = vld [vmem:[%s1374 + $0x78] sm:$0xff]
    %s1391 = scalar_lea.vmem %s2, 2
    %v1392 = vld [vmem:[%s1391] sm:$0x1]
    %v1394 = vlaneseq
    %v1395 = vshrl.u32 %v1394, 7
    %v1396 = vsub.s32 0, %v1395
    %v1397 = vrot.slane %v1392, %v1396
    %1399 = vmatprep.subr.mxu0 0.0
    %v1400 = vand.u32 %v1390, 4294901760
    %1401 = vmatpush1.msra.mxu0 %v1400
    %1402 = vmatprep.subr.mxu0 0.0
    %v1403 = vand.u32 %v1389, 4294901760
    %1404 = vmatpush1.msra.mxu0 %v1403
    %1405 = vmatprep.subr.mxu0 0.0
    %v1406 = vand.u32 %v1388, 4294901760
    %1407 = vmatpush1.msra.mxu0 %v1406
    %1408 = vmatprep.subr.mxu0 0.0
    %v1409 = vand.u32 %v1387, 4294901760
    %1410 = vmatpush1.msra.mxu0 %v1409
    %1411 = vmatprep.subr.mxu0 0.0
    %v1412 = vand.u32 %v1386, 4294901760
    %1413 = vmatpush1.msra.mxu0 %v1412
    %1414 = vmatprep.subr.mxu0 0.0
    %v1415 = vand.u32 %v1385, 4294901760
    %1416 = vmatpush1.msra.mxu0 %v1415
    %1417 = vmatprep.subr.mxu0 0.0
    %v1418 = vand.u32 %v1384, 4294901760
    %1419 = vmatpush1.msra.mxu0 %v1418
    %1420 = vmatprep.subr.mxu0 0.0
    %v1421 = vand.u32 %v1383, 4294901760
    %1422 = vmatpush1.msra.mxu0 %v1421
    %1423 = vmatprep.subr.mxu0 0.0
    %v1424 = vand.u32 %v1382, 4294901760
    %1425 = vmatpush1.msra.mxu0 %v1424
    %1426 = vmatprep.subr.mxu0 0.0
    %v1427 = vand.u32 %v1381, 4294901760
    %1428 = vmatpush1.msra.mxu0 %v1427
    %1429 = vmatprep.subr.mxu0 0.0
    %v1430 = vand.u32 %v1380, 4294901760
    %1431 = vmatpush1.msra.mxu0 %v1430
    %1432 = vmatprep.subr.mxu0 0.0
    %v1433 = vand.u32 %v1379, 4294901760
    %1434 = vmatpush1.msra.mxu0 %v1433
    %1435 = vmatprep.subr.mxu0 0.0
    %v1436 = vand.u32 %v1378, 4294901760
    %1437 = vmatpush1.msra.mxu0 %v1436
    %1438 = vmatprep.subr.mxu0 0.0
    %v1439 = vand.u32 %v1377, 4294901760
    %1440 = vmatpush1.msra.mxu0 %v1439
    %1441 = vmatprep.subr.mxu0 0.0
    %v1442 = vand.u32 %v1376, 4294901760
    %1443 = vmatpush1.msra.mxu0 %v1442
    %1444 = vmatprep.subr.mxu0 0.0
    %v1445 = vand.u32 %v1375, 4294901760
    %1446 = vmatpush1.msra.mxu0 %v1445
    %1447 = vmatprep.subr.mxu0 0.0
    %1448 = vmatpush2.msra.mxu0 0.0
    %1449 = vmatprep.subr.mxu0 0.0
    %1450 = vmatpush2.msra.mxu0 0.0
    %1451 = vmatprep.subr.mxu0 0.0
    %1452 = vmatpush2.msra.mxu0 0.0
    %1453 = vmatprep.subr.mxu0 0.0
    %1454 = vmatpush2.msra.mxu0 0.0
    %1455 = vmatprep.subr.mxu0 0.0
    %1456 = vmatpush2.msra.mxu0 0.0
    %1457 = vmatprep.subr.mxu0 0.0
    %1458 = vmatpush2.msra.mxu0 0.0
    %1459 = vmatprep.subr.mxu0 0.0
    %1460 = vmatpush2.msra.mxu0 0.0
    %1461 = vmatprep.subr.mxu0 0.0
    %1462 = vmatpush2.msra.mxu0 0.0
    %1463 = vmatprep.subr.mxu0 0.0
    %1464 = vmatpush2.msra.mxu0 0.0
    %1465 = vmatprep.subr.mxu0 0.0
    %1466 = vmatpush2.msra.mxu0 0.0
    %1467 = vmatprep.subr.mxu0 0.0
    %1468 = vmatpush2.msra.mxu0 0.0
    %1469 = vmatprep.subr.mxu0 0.0
    %1470 = vmatpush2.msra.mxu0 0.0
    %1471 = vmatprep.subr.mxu0 0.0
    %1472 = vmatpush2.msra.mxu0 0.0
    %1473 = vmatprep.subr.mxu0 0.0
    %1474 = vmatpush2.msra.mxu0 0.0
    %1475 = vmatprep.subr.mxu0 0.0
    %1476 = vmatpush2.msra.mxu0 0.0
    %1477 = vmatprep.subr.mxu0 0.0
    %1478 = vmatpush2.msra.mxu0 0.0
    %1479 = vmatprep.mubr.f32.mxu0 0.0
    %v1480 = vand.u32 %v1373, 4294901760
    %v1481 = vsub.f32 %v1373, %v1480
    %v1482 = vand.u32 %v1481, 4294901760
    %v1483 = vsub.f32 %v1481, %v1482
    %v1484 = vand.u32 %v1483, 4294901760
    %1485 = vmatmul.mubr.f32.gmra.mxu0 %v1484
    %v1486 = vpop.f32.mrf.mxu0
    %v1487 = vadd.f32 %v1397, %v1486
    %v1488 = vpop.f32.mrf.mxu0
    %1489 = vdwg.mxu0
    %1490 = vmatprep.subr.mxu0 0.0
    %v1491 = vand.u32 %v1390, 4294901760
    %v1492 = vsub.f32 %v1390, %v1491
    %v1493 = vand.u32 %v1492, 4294901760
    %v1494 = vsub.f32 %v1492, %v1493
    %v1495 = vand.u32 %v1494, 4294901760
    %1496 = vmatpush1.msra.mxu0 %v1495
    %1497 = vmatprep.subr.mxu0 0.0
    %v1498 = vand.u32 %v1389, 4294901760
    %v1499 = vsub.f32 %v1389, %v1498
    %v1500 = vand.u32 %v1499, 4294901760
    %v1501 = vsub.f32 %v1499, %v1500
    %v1502 = vand.u32 %v1501, 4294901760
    %1503 = vmatpush1.msra.mxu0 %v1502
    %1504 = vmatprep.subr.mxu0 0.0
    %v1505 = vand.u32 %v1388, 4294901760
    %v1506 = vsub.f32 %v1388, %v1505
    %v1507 = vand.u32 %v1506, 4294901760
    %v1508 = vsub.f32 %v1506, %v1507
    %v1509 = vand.u32 %v1508, 4294901760
    %1510 = vmatpush1.msra.mxu0 %v1509
    %1511 = vmatprep.subr.mxu0 0.0
    %v1512 = vand.u32 %v1387, 4294901760
    %v1513 = vsub.f32 %v1387, %v1512
    %v1514 = vand.u32 %v1513, 4294901760
    %v1515 = vsub.f32 %v1513, %v1514
    %v1516 = vand.u32 %v1515, 4294901760
    %1517 = vmatpush1.msra.mxu0 %v1516
    %1518 = vmatprep.subr.mxu0 0.0
    %v1519 = vand.u32 %v1386, 4294901760
    %v1520 = vsub.f32 %v1386, %v1519
    %v1521 = vand.u32 %v1520, 4294901760
    %v1522 = vsub.f32 %v1520, %v1521
    %v1523 = vand.u32 %v1522, 4294901760
    %1524 = vmatpush1.msra.mxu0 %v1523
    %1525 = vmatprep.subr.mxu0 0.0
    %v1526 = vand.u32 %v1385, 4294901760
    %v1527 = vsub.f32 %v1385, %v1526
    %v1528 = vand.u32 %v1527, 4294901760
    %v1529 = vsub.f32 %v1527, %v1528
    %v1530 = vand.u32 %v1529, 4294901760
    %1531 = vmatpush1.msra.mxu0 %v1530
    %1532 = vmatprep.subr.mxu0 0.0
    %v1533 = vand.u32 %v1384, 4294901760
    %v1534 = vsub.f32 %v1384, %v1533
    %v1535 = vand.u32 %v1534, 4294901760
    %v1536 = vsub.f32 %v1534, %v1535
    %v1537 = vand.u32 %v1536, 4294901760
    %1538 = vmatpush1.msra.mxu0 %v1537
    %1539 = vmatprep.subr.mxu0 0.0
    %v1540 = vand.u32 %v1383, 4294901760
    %v1541 = vsub.f32 %v1383, %v1540
    %v1542 = vand.u32 %v1541, 4294901760
    %v1543 = vsub.f32 %v1541, %v1542
    %v1544 = vand.u32 %v1543, 4294901760
    %1545 = vmatpush1.msra.mxu0 %v1544
    %1546 = vmatprep.subr.mxu0 0.0
    %v1547 = vand.u32 %v1382, 4294901760
    %v1548 = vsub.f32 %v1382, %v1547
    %v1549 = vand.u32 %v1548, 4294901760
    %v1550 = vsub.f32 %v1548, %v1549
    %v1551 = vand.u32 %v1550, 4294901760
    %1552 = vmatpush1.msra.mxu0 %v1551
    %1553 = vmatprep.subr.mxu0 0.0
    %v1554 = vand.u32 %v1381, 4294901760
    %v1555 = vsub.f32 %v1381, %v1554
    %v1556 = vand.u32 %v1555, 4294901760
    %v1557 = vsub.f32 %v1555, %v1556
    %v1558 = vand.u32 %v1557, 4294901760
    %1559 = vmatpush1.msra.mxu0 %v1558
    %1560 = vmatprep.subr.mxu0 0.0
    %v1561 = vand.u32 %v1380, 4294901760
    %v1562 = vsub.f32 %v1380, %v1561
    %v1563 = vand.u32 %v1562, 4294901760
    %v1564 = vsub.f32 %v1562, %v1563
    %v1565 = vand.u32 %v1564, 4294901760
    %1566 = vmatpush1.msra.mxu0 %v1565
    %1567 = vmatprep.subr.mxu0 0.0
    %v1568 = vand.u32 %v1379, 4294901760
    %v1569 = vsub.f32 %v1379, %v1568
    %v1570 = vand.u32 %v1569, 4294901760
    %v1571 = vsub.f32 %v1569, %v1570
    %v1572 = vand.u32 %v1571, 4294901760
    %1573 = vmatpush1.msra.mxu0 %v1572
    %1574 = vmatprep.subr.mxu0 0.0
    %v1575 = vand.u32 %v1378, 4294901760
    %v1576 = vsub.f32 %v1378, %v1575
    %v1577 = vand.u32 %v1576, 4294901760
    %v1578 = vsub.f32 %v1576, %v1577
    %v1579 = vand.u32 %v1578, 4294901760
    %1580 = vmatpush1.msra.mxu0 %v1579
    %1581 = vmatprep.subr.mxu0 0.0
    %v1582 = vand.u32 %v1377, 4294901760
    %v1583 = vsub.f32 %v1377, %v1582
    %v1584 = vand.u32 %v1583, 4294901760
    %v1585 = vsub.f32 %v1583, %v1584
    %v1586 = vand.u32 %v1585, 4294901760
    %1587 = vmatpush1.msra.mxu0 %v1586
    %1588 = vmatprep.subr.mxu0 0.0
    %v1589 = vand.u32 %v1376, 4294901760
    %v1590 = vsub.f32 %v1376, %v1589
    %v1591 = vand.u32 %v1590, 4294901760
    %v1592 = vsub.f32 %v1590, %v1591
    %v1593 = vand.u32 %v1592, 4294901760
    %1594 = vmatpush1.msra.mxu0 %v1593
    %1595 = vmatprep.subr.mxu0 0.0
    %v1596 = vand.u32 %v1375, 4294901760
    %v1597 = vsub.f32 %v1375, %v1596
    %v1598 = vand.u32 %v1597, 4294901760
    %v1599 = vsub.f32 %v1597, %v1598
    %v1600 = vand.u32 %v1599, 4294901760
    %1601 = vmatpush1.msra.mxu0 %v1600
    %1602 = vmatprep.subr.mxu0 0.0
    %1603 = vmatpush2.msra.mxu0 0.0
    %1604 = vmatprep.subr.mxu0 0.0
    %1605 = vmatpush2.msra.mxu0 0.0
    %1606 = vmatprep.subr.mxu0 0.0
    %1607 = vmatpush2.msra.mxu0 0.0
    %1608 = vmatprep.subr.mxu0 0.0
    %1609 = vmatpush2.msra.mxu0 0.0
    %1610 = vmatprep.subr.mxu0 0.0
    %1611 = vmatpush2.msra.mxu0 0.0
    %1612 = vmatprep.subr.mxu0 0.0
    %1613 = vmatpush2.msra.mxu0 0.0
    %1614 = vmatprep.subr.mxu0 0.0
    %1615 = vmatpush2.msra.mxu0 0.0
    %1616 = vmatprep.subr.mxu0 0.0
    %1617 = vmatpush2.msra.mxu0 0.0
    %1618 = vmatprep.subr.mxu0 0.0
    %1619 = vmatpush2.msra.mxu0 0.0
    %1620 = vmatprep.subr.mxu0 0.0
    %1621 = vmatpush2.msra.mxu0 0.0
    %1622 = vmatprep.subr.mxu0 0.0
    %1623 = vmatpush2.msra.mxu0 0.0
    %1624 = vmatprep.subr.mxu0 0.0
    %1625 = vmatpush2.msra.mxu0 0.0
    %1626 = vmatprep.subr.mxu0 0.0
    %1627 = vmatpush2.msra.mxu0 0.0
    %1628 = vmatprep.subr.mxu0 0.0
    %1629 = vmatpush2.msra.mxu0 0.0
    %1630 = vmatprep.subr.mxu0 0.0
    %1631 = vmatpush2.msra.mxu0 0.0
    %1632 = vmatprep.subr.mxu0 0.0
    %1633 = vmatpush2.msra.mxu0 0.0
    %1634 = vmatprep.mubr.f32.mxu0 0.0
    %v1635 = vand.u32 %v1373, 4294901760
    %1636 = vmatmul.mubr.f32.gmra.mxu0 %v1635
    %v1637 = vpop.f32.mrf.mxu0
    %v1638 = vadd.f32 %v1487, %v1637
    %v1639 = vpop.f32.mrf.mxu0
    %1640 = vdwg.mxu0
    %1641 = vmatprep.subr.mxu0 0.0
    %v1642 = vand.u32 %v1390, 4294901760
    %v1643 = vsub.f32 %v1390, %v1642
    %1644 = vmatpush1.msra.mxu0 %v1643
    %1645 = vmatprep.subr.mxu0 0.0
    %v1646 = vand.u32 %v1389, 4294901760
    %v1647 = vsub.f32 %v1389, %v1646
    %1648 = vmatpush1.msra.mxu0 %v1647
    %1649 = vmatprep.subr.mxu0 0.0
    %v1650 = vand.u32 %v1388, 4294901760
    %v1651 = vsub.f32 %v1388, %v1650
    %1652 = vmatpush1.msra.mxu0 %v1651
    %1653 = vmatprep.subr.mxu0 0.0
    %v1654 = vand.u32 %v1387, 4294901760
    %v1655 = vsub.f32 %v1387, %v1654
    %1656 = vmatpush1.msra.mxu0 %v1655
    %1657 = vmatprep.subr.mxu0 0.0
    %v1658 = vand.u32 %v1386, 4294901760
    %v1659 = vsub.f32 %v1386, %v1658
    %1660 = vmatpush1.msra.mxu0 %v1659
    %1661 = vmatprep.subr.mxu0 0.0
    %v1662 = vand.u32 %v1385, 4294901760
    %v1663 = vsub.f32 %v1385, %v1662
    %1664 = vmatpush1.msra.mxu0 %v1663
    %1665 = vmatprep.subr.mxu0 0.0
    %v1666 = vand.u32 %v1384, 4294901760
    %v1667 = vsub.f32 %v1384, %v1666
    %1668 = vmatpush1.msra.mxu0 %v1667
    %1669 = vmatprep.subr.mxu0 0.0
    %v1670 = vand.u32 %v1383, 4294901760
    %v1671 = vsub.f32 %v1383, %v1670
    %1672 = vmatpush1.msra.mxu0 %v1671
    %1673 = vmatprep.subr.mxu0 0.0
    %v1674 = vand.u32 %v1382, 4294901760
    %v1675 = vsub.f32 %v1382, %v1674
    %1676 = vmatpush1.msra.mxu0 %v1675
    %1677 = vmatprep.subr.mxu0 0.0
    %v1678 = vand.u32 %v1381, 4294901760
    %v1679 = vsub.f32 %v1381, %v1678
    %1680 = vmatpush1.msra.mxu0 %v1679
    %1681 = vmatprep.subr.mxu0 0.0
    %v1682 = vand.u32 %v1380, 4294901760
    %v1683 = vsub.f32 %v1380, %v1682
    %1684 = vmatpush1.msra.mxu0 %v1683
    %1685 = vmatprep.subr.mxu0 0.0
    %v1686 = vand.u32 %v1379, 4294901760
    %v1687 = vsub.f32 %v1379, %v1686
    %1688 = vmatpush1.msra.mxu0 %v1687
    %1689 = vmatprep.subr.mxu0 0.0
    %v1690 = vand.u32 %v1378, 4294901760
    %v1691 = vsub.f32 %v1378, %v1690
    %1692 = vmatpush1.msra.mxu0 %v1691
    %1693 = vmatprep.subr.mxu0 0.0
    %v1694 = vand.u32 %v1377, 4294901760
    %v1695 = vsub.f32 %v1377, %v1694
    %1696 = vmatpush1.msra.mxu0 %v1695
    %1697 = vmatprep.subr.mxu0 0.0
    %v1698 = vand.u32 %v1376, 4294901760
    %v1699 = vsub.f32 %v1376, %v1698
    %1700 = vmatpush1.msra.mxu0 %v1699
    %1701 = vmatprep.subr.mxu0 0.0
    %v1702 = vand.u32 %v1375, 4294901760
    %v1703 = vsub.f32 %v1375, %v1702
    %1704 = vmatpush1.msra.mxu0 %v1703
    %1705 = vmatprep.subr.mxu0 0.0
    %1706 = vmatpush2.msra.mxu0 0.0
    %1707 = vmatprep.subr.mxu0 0.0
    %1708 = vmatpush2.msra.mxu0 0.0
    %1709 = vmatprep.subr.mxu0 0.0
    %1710 = vmatpush2.msra.mxu0 0.0
    %1711 = vmatprep.subr.mxu0 0.0
    %1712 = vmatpush2.msra.mxu0 0.0
    %1713 = vmatprep.subr.mxu0 0.0
    %1714 = vmatpush2.msra.mxu0 0.0
    %1715 = vmatprep.subr.mxu0 0.0
    %1716 = vmatpush2.msra.mxu0 0.0
    %1717 = vmatprep.subr.mxu0 0.0
    %1718 = vmatpush2.msra.mxu0 0.0
    %1719 = vmatprep.subr.mxu0 0.0
    %1720 = vmatpush2.msra.mxu0 0.0
    %1721 = vmatprep.subr.mxu0 0.0
    %1722 = vmatpush2.msra.mxu0 0.0
    %1723 = vmatprep.subr.mxu0 0.0
    %1724 = vmatpush2.msra.mxu0 0.0
    %1725 = vmatprep.subr.mxu0 0.0
    %1726 = vmatpush2.msra.mxu0 0.0
    %1727 = vmatprep.subr.mxu0 0.0
    %1728 = vmatpush2.msra.mxu0 0.0
    %1729 = vmatprep.subr.mxu0 0.0
    %1730 = vmatpush2.msra.mxu0 0.0
    %1731 = vmatprep.subr.mxu0 0.0
    %1732 = vmatpush2.msra.mxu0 0.0
    %1733 = vmatprep.subr.mxu0 0.0
    %1734 = vmatpush2.msra.mxu0 0.0
    %1735 = vmatprep.subr.mxu0 0.0
    %1736 = vmatpush2.msra.mxu0 0.0
    %1737 = vmatprep.mubr.f32.mxu0 0.0
    %v1738 = vand.u32 %v1373, 4294901760
    %v1739 = vsub.f32 %v1373, %v1738
    %1740 = vmatmul.mubr.f32.gmra.mxu0 %v1739
    %v1741 = vpop.f32.mrf.mxu0
    %v1742 = vadd.f32 %v1638, %v1741
    %v1743 = vpop.f32.mrf.mxu0
    %1744 = vdwg.mxu0
    %1745 = vmatprep.subr.mxu0 0.0
    %v1746 = vand.u32 %v1390, 4294901760
    %1747 = vmatpush1.msra.mxu0 %v1746
    %1748 = vmatprep.subr.mxu0 0.0
    %v1749 = vand.u32 %v1389, 4294901760
    %1750 = vmatpush1.msra.mxu0 %v1749
    %1751 = vmatprep.subr.mxu0 0.0
    %v1752 = vand.u32 %v1388, 4294901760
    %1753 = vmatpush1.msra.mxu0 %v1752
    %1754 = vmatprep.subr.mxu0 0.0
    %v1755 = vand.u32 %v1387, 4294901760
    %1756 = vmatpush1.msra.mxu0 %v1755
    %1757 = vmatprep.subr.mxu0 0.0
    %v1758 = vand.u32 %v1386, 4294901760
    %1759 = vmatpush1.msra.mxu0 %v1758
    %1760 = vmatprep.subr.mxu0 0.0
    %v1761 = vand.u32 %v1385, 4294901760
    %1762 = vmatpush1.msra.mxu0 %v1761
    %1763 = vmatprep.subr.mxu0 0.0
    %v1764 = vand.u32 %v1384, 4294901760
    %1765 = vmatpush1.msra.mxu0 %v1764
    %1766 = vmatprep.subr.mxu0 0.0
    %v1767 = vand.u32 %v1383, 4294901760
    %1768 = vmatpush1.msra.mxu0 %v1767
    %1769 = vmatprep.subr.mxu0 0.0
    %v1770 = vand.u32 %v1382, 4294901760
    %1771 = vmatpush1.msra.mxu0 %v1770
    %1772 = vmatprep.subr.mxu0 0.0
    %v1773 = vand.u32 %v1381, 4294901760
    %1774 = vmatpush1.msra.mxu0 %v1773
    %1775 = vmatprep.subr.mxu0 0.0
    %v1776 = vand.u32 %v1380, 4294901760
    %1777 = vmatpush1.msra.mxu0 %v1776
    %1778 = vmatprep.subr.mxu0 0.0
    %v1779 = vand.u32 %v1379, 4294901760
    %1780 = vmatpush1.msra.mxu0 %v1779
    %1781 = vmatprep.subr.mxu0 0.0
    %v1782 = vand.u32 %v1378, 4294901760
    %1783 = vmatpush1.msra.mxu0 %v1782
    %1784 = vmatprep.subr.mxu0 0.0
    %v1785 = vand.u32 %v1377, 4294901760
    %1786 = vmatpush1.msra.mxu0 %v1785
    %1787 = vmatprep.subr.mxu0 0.0
    %v1788 = vand.u32 %v1376, 4294901760
    %1789 = vmatpush1.msra.mxu0 %v1788
    %1790 = vmatprep.subr.mxu0 0.0
    %v1791 = vand.u32 %v1375, 4294901760
    %1792 = vmatpush1.msra.mxu0 %v1791
    %1793 = vmatprep.subr.mxu0 0.0
    %1794 = vmatpush2.msra.mxu0 0.0
    %1795 = vmatprep.subr.mxu0 0.0
    %1796 = vmatpush2.msra.mxu0 0.0
    %1797 = vmatprep.subr.mxu0 0.0
    %1798 = vmatpush2.msra.mxu0 0.0
    %1799 = vmatprep.subr.mxu0 0.0
    %1800 = vmatpush2.msra.mxu0 0.0
    %1801 = vmatprep.subr.mxu0 0.0
    %1802 = vmatpush2.msra.mxu0 0.0
    %1803 = vmatprep.subr.mxu0 0.0
    %1804 = vmatpush2.msra.mxu0 0.0
    %1805 = vmatprep.subr.mxu0 0.0
    %1806 = vmatpush2.msra.mxu0 0.0
    %1807 = vmatprep.subr.mxu0 0.0
    %1808 = vmatpush2.msra.mxu0 0.0
    %1809 = vmatprep.subr.mxu0 0.0
    %1810 = vmatpush2.msra.mxu0 0.0
    %1811 = vmatprep.subr.mxu0 0.0
    %1812 = vmatpush2.msra.mxu0 0.0
    %1813 = vmatprep.subr.mxu0 0.0
    %1814 = vmatpush2.msra.mxu0 0.0
    %1815 = vmatprep.subr.mxu0 0.0
    %1816 = vmatpush2.msra.mxu0 0.0
    %1817 = vmatprep.subr.mxu0 0.0
    %1818 = vmatpush2.msra.mxu0 0.0
    %1819 = vmatprep.subr.mxu0 0.0
    %1820 = vmatpush2.msra.mxu0 0.0
    %1821 = vmatprep.subr.mxu0 0.0
    %1822 = vmatpush2.msra.mxu0 0.0
    %1823 = vmatprep.subr.mxu0 0.0
    %1824 = vmatpush2.msra.mxu0 0.0
    %1825 = vmatprep.mubr.f32.mxu0 0.0
    %v1826 = vand.u32 %v1373, 4294901760
    %v1827 = vsub.f32 %v1373, %v1826
    %v1828 = vand.u32 %v1827, 4294901760
    %1829 = vmatmul.mubr.f32.gmra.mxu0 %v1828
    %v1830 = vpop.f32.mrf.mxu0
    %v1831 = vadd.f32 %v1742, %v1830
    %v1832 = vpop.f32.mrf.mxu0
    %1833 = vdwg.mxu0
    %1834 = vmatprep.subr.mxu0 0.0
    %v1835 = vand.u32 %v1390, 4294901760
    %v1836 = vsub.f32 %v1390, %v1835
    %v1837 = vand.u32 %v1836, 4294901760
    %1838 = vmatpush1.msra.mxu0 %v1837
    %1839 = vmatprep.subr.mxu0 0.0
    %v1840 = vand.u32 %v1389, 4294901760
    %v1841 = vsub.f32 %v1389, %v1840
    %v1842 = vand.u32 %v1841, 4294901760
    %1843 = vmatpush1.msra.mxu0 %v1842
    %1844 = vmatprep.subr.mxu0 0.0
    %v1845 = vand.u32 %v1388, 4294901760
    %v1846 = vsub.f32 %v1388, %v1845
    %v1847 = vand.u32 %v1846, 4294901760
    %1848 = vmatpush1.msra.mxu0 %v1847
    %1849 = vmatprep.subr.mxu0 0.0
    %v1850 = vand.u32 %v1387, 4294901760
    %v1851 = vsub.f32 %v1387, %v1850
    %v1852 = vand.u32 %v1851, 4294901760
    %1853 = vmatpush1.msra.mxu0 %v1852
    %1854 = vmatprep.subr.mxu0 0.0
    %v1855 = vand.u32 %v1386, 4294901760
    %v1856 = vsub.f32 %v1386, %v1855
    %v1857 = vand.u32 %v1856, 4294901760
    %1858 = vmatpush1.msra.mxu0 %v1857
    %1859 = vmatprep.subr.mxu0 0.0
    %v1860 = vand.u32 %v1385, 4294901760
    %v1861 = vsub.f32 %v1385, %v1860
    %v1862 = vand.u32 %v1861, 4294901760
    %1863 = vmatpush1.msra.mxu0 %v1862
    %1864 = vmatprep.subr.mxu0 0.0
    %v1865 = vand.u32 %v1384, 4294901760
    %v1866 = vsub.f32 %v1384, %v1865
    %v1867 = vand.u32 %v1866, 4294901760
    %1868 = vmatpush1.msra.mxu0 %v1867
    %1869 = vmatprep.subr.mxu0 0.0
    %v1870 = vand.u32 %v1383, 4294901760
    %v1871 = vsub.f32 %v1383, %v1870
    %v1872 = vand.u32 %v1871, 4294901760
    %1873 = vmatpush1.msra.mxu0 %v1872
    %1874 = vmatprep.subr.mxu0 0.0
    %v1875 = vand.u32 %v1382, 4294901760
    %v1876 = vsub.f32 %v1382, %v1875
    %v1877 = vand.u32 %v1876, 4294901760
    %1878 = vmatpush1.msra.mxu0 %v1877
    %1879 = vmatprep.subr.mxu0 0.0
    %v1880 = vand.u32 %v1381, 4294901760
    %v1881 = vsub.f32 %v1381, %v1880
    %v1882 = vand.u32 %v1881, 4294901760
    %1883 = vmatpush1.msra.mxu0 %v1882
    %1884 = vmatprep.subr.mxu0 0.0
    %v1885 = vand.u32 %v1380, 4294901760
    %v1886 = vsub.f32 %v1380, %v1885
    %v1887 = vand.u32 %v1886, 4294901760
    %1888 = vmatpush1.msra.mxu0 %v1887
    %1889 = vmatprep.subr.mxu0 0.0
    %v1890 = vand.u32 %v1379, 4294901760
    %v1891 = vsub.f32 %v1379, %v1890
    %v1892 = vand.u32 %v1891, 4294901760
    %1893 = vmatpush1.msra.mxu0 %v1892
    %1894 = vmatprep.subr.mxu0 0.0
    %v1895 = vand.u32 %v1378, 4294901760
    %v1896 = vsub.f32 %v1378, %v1895
    %v1897 = vand.u32 %v1896, 4294901760
    %1898 = vmatpush1.msra.mxu0 %v1897
    %1899 = vmatprep.subr.mxu0 0.0
    %v1900 = vand.u32 %v1377, 4294901760
    %v1901 = vsub.f32 %v1377, %v1900
    %v1902 = vand.u32 %v1901, 4294901760
    %1903 = vmatpush1.msra.mxu0 %v1902
    %1904 = vmatprep.subr.mxu0 0.0
    %v1905 = vand.u32 %v1376, 4294901760
    %v1906 = vsub.f32 %v1376, %v1905
    %v1907 = vand.u32 %v1906, 4294901760
    %1908 = vmatpush1.msra.mxu0 %v1907
    %1909 = vmatprep.subr.mxu0 0.0
    %v1910 = vand.u32 %v1375, 4294901760
    %v1911 = vsub.f32 %v1375, %v1910
    %v1912 = vand.u32 %v1911, 4294901760
    %1913 = vmatpush1.msra.mxu0 %v1912
    %1914 = vmatprep.subr.mxu0 0.0
    %1915 = vmatpush2.msra.mxu0 0.0
    %1916 = vmatprep.subr.mxu0 0.0
    %1917 = vmatpush2.msra.mxu0 0.0
    %1918 = vmatprep.subr.mxu0 0.0
    %1919 = vmatpush2.msra.mxu0 0.0
    %1920 = vmatprep.subr.mxu0 0.0
    %1921 = vmatpush2.msra.mxu0 0.0
    %1922 = vmatprep.subr.mxu0 0.0
    %1923 = vmatpush2.msra.mxu0 0.0
    %1924 = vmatprep.subr.mxu0 0.0
    %1925 = vmatpush2.msra.mxu0 0.0
    %1926 = vmatprep.subr.mxu0 0.0
    %1927 = vmatpush2.msra.mxu0 0.0
    %1928 = vmatprep.subr.mxu0 0.0
    %1929 = vmatpush2.msra.mxu0 0.0
    %1930 = vmatprep.subr.mxu0 0.0
    %1931 = vmatpush2.msra.mxu0 0.0
    %1932 = vmatprep.subr.mxu0 0.0
    %1933 = vmatpush2.msra.mxu0 0.0
    %1934 = vmatprep.subr.mxu0 0.0
    %1935 = vmatpush2.msra.mxu0 0.0
    %1936 = vmatprep.subr.mxu0 0.0
    %1937 = vmatpush2.msra.mxu0 0.0
    %1938 = vmatprep.subr.mxu0 0.0
    %1939 = vmatpush2.msra.mxu0 0.0
    %1940 = vmatprep.subr.mxu0 0.0
    %1941 = vmatpush2.msra.mxu0 0.0
    %1942 = vmatprep.subr.mxu0 0.0
    %1943 = vmatpush2.msra.mxu0 0.0
    %1944 = vmatprep.subr.mxu0 0.0
    %1945 = vmatpush2.msra.mxu0 0.0
    %1946 = vmatprep.mubr.f32.mxu0 0.0
    %v1947 = vand.u32 %v1373, 4294901760
    %1948 = vmatmul.mubr.f32.gmra.mxu0 %v1947
    %v1949 = vpop.f32.mrf.mxu0
    %v1950 = vadd.f32 %v1831, %v1949
    %v1951 = vpop.f32.mrf.mxu0
    %1952 = vdwg.mxu0
    %1953 = vmatprep.subr.mxu0 0.0
    %v1954 = vand.u32 %v1390, 4294901760
    %1955 = vmatpush1.msra.mxu0 %v1954
    %1956 = vmatprep.subr.mxu0 0.0
    %v1957 = vand.u32 %v1389, 4294901760
    %1958 = vmatpush1.msra.mxu0 %v1957
    %1959 = vmatprep.subr.mxu0 0.0
    %v1960 = vand.u32 %v1388, 4294901760
    %1961 = vmatpush1.msra.mxu0 %v1960
    %1962 = vmatprep.subr.mxu0 0.0
    %v1963 = vand.u32 %v1387, 4294901760
    %1964 = vmatpush1.msra.mxu0 %v1963
    %1965 = vmatprep.subr.mxu0 0.0
    %v1966 = vand.u32 %v1386, 4294901760
    %1967 = vmatpush1.msra.mxu0 %v1966
    %1968 = vmatprep.subr.mxu0 0.0
    %v1969 = vand.u32 %v1385, 4294901760
    %1970 = vmatpush1.msra.mxu0 %v1969
    %1971 = vmatprep.subr.mxu0 0.0
    %v1972 = vand.u32 %v1384, 4294901760
    %1973 = vmatpush1.msra.mxu0 %v1972
    %1974 = vmatprep.subr.mxu0 0.0
    %v1975 = vand.u32 %v1383, 4294901760
    %1976 = vmatpush1.msra.mxu0 %v1975
    %1977 = vmatprep.subr.mxu0 0.0
    %v1978 = vand.u32 %v1382, 4294901760
    %1979 = vmatpush1.msra.mxu0 %v1978
    %1980 = vmatprep.subr.mxu0 0.0
    %v1981 = vand.u32 %v1381, 4294901760
    %1982 = vmatpush1.msra.mxu0 %v1981
    %1983 = vmatprep.subr.mxu0 0.0
    %v1984 = vand.u32 %v1380, 4294901760
    %1985 = vmatpush1.msra.mxu0 %v1984
    %1986 = vmatprep.subr.mxu0 0.0
    %v1987 = vand.u32 %v1379, 4294901760
    %1988 = vmatpush1.msra.mxu0 %v1987
    %1989 = vmatprep.subr.mxu0 0.0
    %v1990 = vand.u32 %v1378, 4294901760
    %1991 = vmatpush1.msra.mxu0 %v1990
    %1992 = vmatprep.subr.mxu0 0.0
    %v1993 = vand.u32 %v1377, 4294901760
    %1994 = vmatpush1.msra.mxu0 %v1993
    %1995 = vmatprep.subr.mxu0 0.0
    %v1996 = vand.u32 %v1376, 4294901760
    %1997 = vmatpush1.msra.mxu0 %v1996
    %1998 = vmatprep.subr.mxu0 0.0
    %v1999 = vand.u32 %v1375, 4294901760
    %2000 = vmatpush1.msra.mxu0 %v1999
    %2001 = vmatprep.subr.mxu0 0.0
    %2002 = vmatpush2.msra.mxu0 0.0
    %2003 = vmatprep.subr.mxu0 0.0
    %2004 = vmatpush2.msra.mxu0 0.0
    %2005 = vmatprep.subr.mxu0 0.0
    %2006 = vmatpush2.msra.mxu0 0.0
    %2007 = vmatprep.subr.mxu0 0.0
    %2008 = vmatpush2.msra.mxu0 0.0
    %2009 = vmatprep.subr.mxu0 0.0
    %2010 = vmatpush2.msra.mxu0 0.0
    %2011 = vmatprep.subr.mxu0 0.0
    %2012 = vmatpush2.msra.mxu0 0.0
    %2013 = vmatprep.subr.mxu0 0.0
    %2014 = vmatpush2.msra.mxu0 0.0
    %2015 = vmatprep.subr.mxu0 0.0
    %2016 = vmatpush2.msra.mxu0 0.0
    %2017 = vmatprep.subr.mxu0 0.0
    %2018 = vmatpush2.msra.mxu0 0.0
    %2019 = vmatprep.subr.mxu0 0.0
    %2020 = vmatpush2.msra.mxu0 0.0
    %2021 = vmatprep.subr.mxu0 0.0
    %2022 = vmatpush2.msra.mxu0 0.0
    %2023 = vmatprep.subr.mxu0 0.0
    %2024 = vmatpush2.msra.mxu0 0.0
    %2025 = vmatprep.subr.mxu0 0.0
    %2026 = vmatpush2.msra.mxu0 0.0
    %2027 = vmatprep.subr.mxu0 0.0
    %2028 = vmatpush2.msra.mxu0 0.0
    %2029 = vmatprep.subr.mxu0 0.0
    %2030 = vmatpush2.msra.mxu0 0.0
    %2031 = vmatprep.subr.mxu0 0.0
    %2032 = vmatpush2.msra.mxu0 0.0
    %2033 = vmatprep.mubr.f32.mxu0 0.0
    %v2034 = vand.u32 %v1373, 4294901760
    %2035 = vmatmul.mubr.f32.gmra.mxu0 %v2034
    %v2036 = vpop.f32.mrf.mxu0
    %v2037 = vadd.f32 %v1950, %v2036
    %v2038 = vpop.f32.mrf.mxu0
    %2039 = vdwg.mxu0
    %v2040 = vxor.u32 %v2037, 2147483648
    %v2041 = vmul.f32 %v2040, 1.442695
    %v2042 = vpow.pop %v2041
    %v2043 = vadd.f32 %v2042, 1.0
    %v2044 = vrcp.pop %v2043
    %v2045 = vmul.f32 1.0, %v2044
    %2046 = vst [vmem:[#allocation7] sm:$0xff] %v2045
    // Predicated region
    $region22: #{tpu_custom_call.1} parent=1 // pred_check
      _
    $region23: #{tpu_custom_call.1} parent=1 // pred_check_branch
      %2048 = sbr.rel (0) target = $region25
    $region24: #{tpu_custom_call.1} parent=1 // pred_region
      %s2050 = ssub.s32 128, 128
      %2051 = vsyncadd [#allocation4], %s2050
      %s2053 = sshll.u32 [#allocation7], 4
      %s2054 = int_to_ptr.vmem [resolvable:$true] %s2053
      %2056 = dma.vmem_to_hbm [thread:$0]  %s2054, 128, %s3, [#allocation4]
    $region25: #{tpu_custom_call.1} parent=1 // pred_fallthru
      _
    // Predicated region
    $region26: #{tpu_custom_call.1} parent=1 // pred_check
      _
    $region27: #{tpu_custom_call.1} parent=1 // pred_check_branch
      %2058 = sbr.rel (0) target = $region29
    $region28: #{tpu_custom_call.1} parent=1 // pred_region
      %2059 = dma.done [#allocation4], 128
    $region29: #{tpu_custom_call.1} parent=1 // pred_fallthru
      _
    %2060 = vsyncpa [#allocation3], 1
    %2061 = vsyncpa [#allocation6], 1
    %2062 = vsyncpa [#allocation4], 1

</llo_original>
